<compile_context>
chip_gen: v6e
topology: v6e:2x2x1
jax: 0.10.0
libtpu: 0.0.40
codegen_flags: <defaults>
</compile_context>

<pallas_src>
import functools

import jax
import jax.numpy as jnp
from jax.experimental import pallas as pl
from jax.experimental.pallas import tpu as pltpu


def _round_up(x, m):
    return ((x + m - 1) // m) * m


_VMEM_LIMIT = 64 * 1024 * 1024


# ---------------------------------------------------------------------------
# Pallas kernel 1: fused W(Cout,K) @ X(K,HW) + bias + ReLU   (HW on the lane axis)
# ---------------------------------------------------------------------------

def _conv_mm_kernel(x_ref, w_ref, b_ref, o_ref, *, relu):
    # x_ref: (1, K, thw) bf16 ; w_ref: (Cout, K) bf16 (BN scale folded)
    # b_ref: (Cout, 1) f32    ; o_ref: (1, Cout, thw)
    y = jnp.dot(w_ref[...], x_ref[0], preferred_element_type=jnp.float32)
    y = y + b_ref[...]
    if relu:
        y = jnp.maximum(y, 0.0)
    o_ref[0] = y.astype(o_ref.dtype)


def _conv_mm_kernel_ktiled(x_ref, w_ref, b_ref, o_ref, acc_ref, *, relu):
    k = pl.program_id(2)

    @pl.when(k == 0)
    def _():
        acc_ref[...] = jnp.zeros_like(acc_ref)

    acc_ref[...] += jnp.dot(w_ref[...], x_ref[0],
                            preferred_element_type=jnp.float32)

    @pl.when(k == pl.num_programs(2) - 1)
    def _():
        y = acc_ref[...] + b_ref[...]
        if relu:
            y = jnp.maximum(y, 0.0)
        o_ref[0] = y.astype(o_ref.dtype)


def fused_matmul_bias_relu(cols, wmat, bias, *, relu=True, out_dtype=jnp.bfloat16):
    """cols: (N, K, HW) bf16, wmat: (Cout, K) bf16, bias: (Cout, 1) f32 -> (N, Cout, HW)."""
    N, K, HW = cols.shape
    Cout = wmat.shape[0]

    # ---- spatial (lane-axis) tiling: full block when small, 512-wide tiles otherwise
    if HW <= 512:
        thw, HWp = HW, HW
    else:
        thw = 512
        HWp = _round_up(HW, thw)
        if HWp != HW:
            cols = jnp.pad(cols, ((0, 0), (0, 0), (0, HWp - HW)))

    # ---- contraction tiling only for very wide K (real ResNet widths)
    if K <= 2048:
        tk, Kp = K, K
    else:
        tk = 512
        Kp = _round_up(K, tk)
        if Kp != K:
            cols = jnp.pad(cols, ((0, 0), (0, Kp - K), (0, 0)))
            wmat = jnp.pad(wmat, ((0, 0), (0, Kp - K)))
    n_k = Kp // tk

    if n_k == 1:
        out = pl.pallas_call(
            functools.partial(_conv_mm_kernel, relu=relu),
            out_shape=jax.ShapeDtypeStruct((N, Cout, HWp), out_dtype),
            grid=(N, HWp // thw),
            in_specs=[
                pl.BlockSpec((1, Kp, thw), lambda n, m: (n, 0, m)),
                pl.BlockSpec((Cout, Kp), lambda n, m: (0, 0)),
                pl.BlockSpec((Cout, 1), lambda n, m: (0, 0)),
            ],
            out_specs=pl.BlockSpec((1, Cout, thw), lambda n, m: (n, 0, m)),
            compiler_params=pltpu.CompilerParams(
                dimension_semantics=("parallel", "parallel"),
                vmem_limit_bytes=_VMEM_LIMIT),
        )(cols, wmat, bias)
    else:
        out = pl.pallas_call(
            functools.partial(_conv_mm_kernel_ktiled, relu=relu),
            out_shape=jax.ShapeDtypeStruct((N, Cout, HWp), out_dtype),
            grid=(N, HWp // thw, n_k),
            in_specs=[
                pl.BlockSpec((1, tk, thw), lambda n, m, k: (n, k, m)),
                pl.BlockSpec((Cout, tk), lambda n, m, k: (0, k)),
                pl.BlockSpec((Cout, 1), lambda n, m, k: (0, 0)),
            ],
            out_specs=pl.BlockSpec((1, Cout, thw), lambda n, m, k: (n, 0, m)),
            scratch_shapes=[pltpu.VMEM((Cout, thw), jnp.float32)],
            compiler_params=pltpu.CompilerParams(
                dimension_semantics=("parallel", "parallel", "arbitrary"),
                vmem_limit_bytes=_VMEM_LIMIT),
        )(cols, wmat, bias)

    return out if HWp == HW else out[..., :HW]


# ---------------------------------------------------------------------------
# Pallas kernel 2: fully fused ASPP head (transposed / lane-dense layout)
#   4 branch matmuls + bias + ReLU -> concat -> ONE projection matmul + bias + ReLU
#   Pool branch enters as a per-image bias.  grid = (N, HW tiles).
# ---------------------------------------------------------------------------

def _aspp_head_kernel(c1_ref, c2_ref, c3_ref, c4_ref,
                      w1_ref, w2_ref, w3_ref, w4_ref,
                      bb_ref, wp_ref, bimg_ref, o_ref):
    P = w1_ref.shape[0]
    rs = []
    for i, (c_ref, w_ref) in enumerate(((c1_ref, w1_ref), (c2_ref, w2_ref),
                                        (c3_ref, w3_ref), (c4_ref, w4_ref))):
        y = jnp.dot(w_ref[...], c_ref[0], preferred_element_type=jnp.float32)  # (P, thw)
        r = jnp.maximum(y + bb_ref[i * P:(i + 1) * P, :], 0.0)                 # bias + ReLU
        rs.append(r.astype(jnp.bfloat16))
    r_cat = jnp.concatenate(rs, axis=0)                                        # (4P, thw) bf16
    z = jnp.dot(wp_ref[...], r_cat, preferred_element_type=jnp.float32)        # (Pout, thw)
    o_ref[0] = jnp.maximum(z + bimg_ref[0], 0.0).astype(o_ref.dtype)


# ---------------------------------------------------------------------------
# im2col glue (plain JAX, NCHW): tap extraction with trace-time empty-tap dropping
# ---------------------------------------------------------------------------

def _im2col_nchw(x, w4d, kh, kw, stride, dilation, padding):
    """x: (N, C, H, W); w4d: (Cout, Cin, kh, kw) (BN scale folded).
    Returns cols (N, K_valid, Ho*Wo), wmat (Cout, K_valid), (Ho, Wo)."""
    N, C, H, W = x.shape
    Ho = (H + 2 * padding - dilation * (kh - 1) - 1) // stride + 1
    Wo = (W + 2 * padding - dilation * (kw - 1) - 1) // stride + 1
    taps, wcols = [], []
    for i in range(kh):
        for j in range(kw):
            oy = i * dilation - padding
            ox = j * dilation - padding
            ylo = 0 if oy >= 0 else (-oy + stride - 1) // stride
            yhi = min(Ho - 1, (H - 1 - oy) // stride)
            xlo = 0 if ox >= 0 else (-ox + stride - 1) // stride
            xhi = min(Wo - 1, (W - 1 - ox) // stride)
            if ylo > yhi or xlo > xhi:
                # tap never lands in-bounds: drop it together with its weight columns
                continue
            src = x[:, :, ylo * stride + oy: yhi * stride + oy + 1: stride,
                          xlo * stride + ox: xhi * stride + ox + 1: stride]
            if ylo == 0 and yhi == Ho - 1 and xlo == 0 and xhi == Wo - 1:
                tap = src
            else:
                tap = jnp.zeros((N, C, Ho, Wo), x.dtype).at[
                    :, :, ylo:yhi + 1, xlo:xhi + 1].set(src)
            taps.append(tap)
            wcols.append(w4d[:, :, i, j])
    cols = jnp.concatenate(taps, axis=1).reshape(N, -1, Ho * Wo)
    wmat = jnp.concatenate(wcols, axis=1)
    return cols, wmat, (Ho, Wo)


def conv_bn_relu(x, w4d, bias, *, stride=1, dilation=1, padding=0, relu=True):
    """x: (N, C, H, W) bf16; w4d: (Cout, Cin, kh, kw) bf16 folded; bias: (Cout,1) f32."""
    N = x.shape[0]
    Cout, _, kh, kw = w4d.shape
    cols, wmat, (Ho, Wo) = _im2col_nchw(x, w4d, kh, kw, stride, dilation, padding)
    y = fused_matmul_bias_relu(cols, wmat, bias, relu=relu)
    return y.reshape(N, Cout, Ho, Wo)


# ---------------------------------------------------------------------------
# ASPP head wrapper
# ---------------------------------------------------------------------------

def aspp_head(x3, p):
    N, C, H, W = x3.shape
    HW = H * W
    P = p["wp_main"].shape[0]

    # branch patch matrices: 1x1 branch is x3 itself; dilated 3x3 branches with
    # trace-time tap dropping (only valid taps kept, weights selected to match)
    c1 = x3.reshape(N, C, HW)
    w1 = p["w1"]
    c2, w2, _ = _im2col_nchw(x3, p["w2"], 3, 3, 1, 12, 12)
    c3, w3, _ = _im2col_nchw(x3, p["w3"], 3, 3, 1, 24, 24)
    c4, w4, _ = _im2col_nchw(x3, p["w4"], 3, 3, 1, 36, 36)

    # global-average-pool branch (pool -> 1x1 conv -> BN -> ReLU -> broadcast):
    # spatially constant per image -> fold through the projection into a per-image bias.
    pooled = jnp.mean(x3.astype(jnp.float32), axis=(2, 3))               # (N, C)
    r5 = jnp.maximum(pooled @ p["pool_w"].T + p["pool_b"], 0.0)          # (N, P)
    bimg = (r5 @ p["wp_pool"].T + p["proj_b"]).reshape(N, P, 1)          # (N, Pout, 1) f32

    # spatial tiling: always tile (and pad) when HW is large so blocks stay VMEM-bounded
    if HW <= 512:
        thw, HWp = HW, HW
    else:
        thw = 512
        HWp = _round_up(HW, thw)
        pad = ((0, 0), (0, 0), (0, HWp - HW))
        c1, c2, c3, c4 = (jnp.pad(c, pad) for c in (c1, c2, c3, c4))

    K1, K2, K3, K4 = c1.shape[1], c2.shape[1], c3.shape[1], c4.shape[1]

    out = pl.pallas_call(
        _aspp_head_kernel,
        out_shape=jax.ShapeDtypeStruct((N, P, HWp), jnp.bfloat16),
        grid=(N, HWp // thw),
        in_specs=[
            pl.BlockSpec((1, K1, thw), lambda n, m: (n, 0, m)),
            pl.BlockSpec((1, K2, thw), lambda n, m: (n, 0, m)),
            pl.BlockSpec((1, K3, thw), lambda n, m: (n, 0, m)),
            pl.BlockSpec((1, K4, thw), lambda n, m: (n, 0, m)),
            pl.BlockSpec((P, K1), lambda n, m: (0, 0)),
            pl.BlockSpec((P, K2), lambda n, m: (0, 0)),
            pl.BlockSpec((P, K3), lambda n, m: (0, 0)),
            pl.BlockSpec((P, K4), lambda n, m: (0, 0)),
            pl.BlockSpec((4 * P, 1), lambda n, m: (0, 0)),
            pl.BlockSpec((P, 4 * P), lambda n, m: (0, 0)),
            pl.BlockSpec((1, P, 1), lambda n, m: (n, 0, 0)),
        ],
        out_specs=pl.BlockSpec((1, P, thw), lambda n, m: (n, 0, m)),
        compiler_params=pltpu.CompilerParams(
            dimension_semantics=("parallel", "parallel"),
            vmem_limit_bytes=_VMEM_LIMIT),
    )(c1, c2, c3, c4, w1, w2, w3, w4, p["bb"], p["wp_main"], bimg)

    if HWp != HW:
        out = out[..., :HW]
    return out.reshape(N, P, H, W)


# ---------------------------------------------------------------------------
# Parameter initialization (BN folded into weights once, bf16 cast once)
# ---------------------------------------------------------------------------

def _conv_bn_fold(key, cout, cin, k):
    k1, k2, k3 = jax.random.split(key, 3)
    w = jax.random.normal(k1, (cout, cin, k, k), jnp.float32) / jnp.sqrt(float(k * k * cin))
    gamma = 1.0 + 0.1 * jax.random.normal(k2, (cout,), jnp.float32)
    beta = 0.1 * jax.random.normal(k3, (cout,), jnp.float32)
    running_mean = jnp.zeros((cout,), jnp.float32)
    running_var = jnp.ones((cout,), jnp.float32)
    eps = 1e-5
    scale = gamma / jnp.sqrt(running_var + eps)
    bias = beta - running_mean * scale
    w_folded = w * scale[:, None, None, None]      # fold BN scale into conv weight
    return w_folded, bias


def init_params(key):
    ks = jax.random.split(key, 9)
    inplanes, P = 32, 16

    bb1_w, bb1_b = _conv_bn_fold(ks[0], 8, 3, 3)            # stride 2: /2
    bb2_w, bb2_b = _conv_bn_fold(ks[1], 16, 8, 3)           # stride 2: /4
    bb3_w, bb3_b = _conv_bn_fold(ks[2], inplanes, 16, 3)    # stride 2: /8
    a1_w, a1_b = _conv_bn_fold(ks[3], P, inplanes, 1)       # 1x1 branch
    a2_w, a2_b = _conv_bn_fold(ks[4], P, inplanes, 3)       # rate 12
    a3_w, a3_b = _conv_bn_fold(ks[5], P, inplanes, 3)       # rate 24
    a4_w, a4_b = _conv_bn_fold(ks[6], P, inplanes, 3)       # rate 36
    ap_w, ap_b = _conv_bn_fold(ks[7], P, inplanes, 1)       # global-pool branch
    pr_w, pr_b = _conv_bn_fold(ks[8], P, 5 * P, 1)          # 1x1 projection

    def bb_layer(w, b):
        return {"w": w.astype(jnp.bfloat16), "b": b.reshape(-1, 1)}

    wp = pr_w.reshape(P, 5 * P)                              # (Pout, 5P), proj BN scale folded
    params = {
        "bb1": bb_layer(bb1_w, bb1_b),
        "bb2": bb_layer(bb2_w, bb2_b),
        "bb3": bb_layer(bb3_w, bb3_b),
        "aspp": {
            "w1": a1_w.reshape(P, inplanes).astype(jnp.bfloat16),   # (P, C) bf16
            "w2": a2_w.astype(jnp.bfloat16),                        # (P, C, 3, 3) bf16
            "w3": a3_w.astype(jnp.bfloat16),
            "w4": a4_w.astype(jnp.bfloat16),
            "bb": jnp.concatenate([a1_b, a2_b, a3_b, a4_b]).reshape(4 * P, 1),  # (4P,1) f32
            "wp_main": wp[:, :4 * P].astype(jnp.bfloat16),          # (Pout, 4P) bf16
            "wp_pool": wp[:, 4 * P:],                               # (Pout, P)  f32 (tiny path)
            "proj_b": pr_b,                                         # (Pout,)    f32
            "pool_w": ap_w.reshape(P, inplanes),                    # (P, C)     f32 folded
            "pool_b": ap_b,                                         # (P,)       f32
        },
    }
    return params


# ---------------------------------------------------------------------------
# DeepLab forward: x, low_level_feat = backbone(input); x = aspp(x); return x
# ---------------------------------------------------------------------------

@jax.jit
def deeplab_forward(x_nchw, params):
    x = x_nchw.astype(jnp.bfloat16)                                  # NCHW end-to-end, bf16

    # ----- backbone (output_stride = 8) -----
    x = conv_bn_relu(x, params["bb1"]["w"], params["bb1"]["b"], stride=2, padding=1)
    x = conv_bn_relu(x, params["bb2"]["w"], params["bb2"]["b"], stride=2, padding=1)
    x3 = conv_bn_relu(x, params["bb3"]["w"], params["bb3"]["b"], stride=2, padding=1)
    # low_level_feat returned by the backbone is unused in DeepLab.forward

    # ----- ASPP (rates 12/24/36, pool branch, concat, 1x1 proj) fully fused -----
    out = aspp_head(x3, params["aspp"])                              # (N, P, H/8, W/8) bf16
    # Dropout(0.5) -> identity in eval mode
    return out.astype(jnp.float32)                                   # already NCHW


if __name__ == "__main__":
    key = jax.random.PRNGKey(0)
    k_param, k_input = jax.random.split(key)
    params = init_params(k_param)

    # small RGB image batch, NCHW like PyTorch
    x = jax.random.normal(k_input, (2, 3, 16, 16), jnp.float32)

    out = deeplab_forward(x, params)
    out = jax.block_until_ready(out)

    assert out.shape == (2, 16, 2, 2), out.shape     # (N, aspp_planes, H/8, W/8)
    assert bool(jnp.all(jnp.isfinite(out)))
    print("KERNEL_OK")
</pallas_src>

<mosaic_0001>
module attributes {stable_mosaic.version = 11 : i64} {
  func.func @_conv_mm_kernel(%arg0: i32, %arg1: i32, %arg2: memref<1x27x64xbf16, #tpu.memory_space<vmem>>, %arg3: memref<8x27xbf16, #tpu.memory_space<vmem>>, %arg4: memref<8x1xf32, #tpu.memory_space<vmem>>, %arg5: memref<1x8x64xbf16, #tpu.memory_space<vmem>>) attributes {dimension_semantics = [#tpu.dimension_semantics<parallel>, #tpu.dimension_semantics<parallel>], iteration_bounds = array<i64: 2, 1>, scalar_prefetch = 0 : i64, scratch_operands = 0 : i64, tpu.core_type = #tpu.core_type<tc>, window_params = [{transform_indices = @transform_0, window_bounds = array<i64: 1, 27, 64>}, {pipeline_mode = #tpu.pipeline_mode<synchronous>, transform_indices = @transform_1, window_bounds = array<i64: 8, 27>}, {pipeline_mode = #tpu.pipeline_mode<synchronous>, transform_indices = @transform_2, window_bounds = array<i64: 8, 1>}, {transform_indices = @transform_3, window_bounds = array<i64: 1, 8, 64>}]} {
    %c0 = arith.constant 0 : index
    %c0_0 = arith.constant 0 : index
    %0 = vector.load %arg3[%c0, %c0_0] : memref<8x27xbf16, #tpu.memory_space<vmem>>, vector<8x27xbf16>
    %c0_1 = arith.constant 0 : index
    %c0_2 = arith.constant 0 : index
    %c0_3 = arith.constant 0 : index
    %1 = vector.load %arg2[%c0_1, %c0_2, %c0_3] : memref<1x27x64xbf16, #tpu.memory_space<vmem>>, vector<1x27x64xbf16>
    %2 = vector.shape_cast %1 : vector<1x27x64xbf16> to vector<27x64xbf16>
    %cst = arith.constant dense<0.000000e+00> : vector<8x64xf32>
    %3 = tpu.matmul %0, %2, %cst {dimension_numbers = #tpu.dot_dimension_numbers<[1], [0], [0], [1], [0, 0, 1, 1], [], []>} : vector<8x27xbf16>, vector<27x64xbf16>, vector<8x64xf32> -> vector<8x64xf32>
    %c0_4 = arith.constant 0 : index
    %c0_5 = arith.constant 0 : index
    %4 = vector.load %arg4[%c0_4, %c0_5] : memref<8x1xf32, #tpu.memory_space<vmem>>, vector<8x1xf32>
    %5 = vector.broadcast %4 : vector<8x1xf32> to vector<8x64xf32>
    %6 = arith.addf %3, %5 : vector<8x64xf32>
    %cst_6 = arith.constant 0.000000e+00 : f32
    %7 = vector.broadcast %cst_6 : f32 to vector<8x64xf32>
    %8 = arith.maximumf %6, %7 : vector<8x64xf32>
    %9 = arith.truncf %8 : vector<8x64xf32> to vector<8x64xbf16>
    %c0_7 = arith.constant 0 : index
    %c0_8 = arith.constant 0 : index
    %c0_9 = arith.constant 0 : index
    %10 = vector.load %arg5[%c0_7, %c0_8, %c0_9] : memref<1x8x64xbf16, #tpu.memory_space<vmem>>, vector<1x8x64xbf16>
    %11 = vector.shape_cast %10 : vector<1x8x64xbf16> to vector<8x64xbf16>
    %12 = vector.shape_cast %9 : vector<8x64xbf16> to vector<1x8x64xbf16>
    tpu.vector_store %arg5[%c0_7, %c0_8, %c0_9], %12 {strides = array<i32>} : memref<1x8x64xbf16, #tpu.memory_space<vmem>>, vector<1x8x64xbf16>,
    return
  }
  func.func @transform_0(%arg0: i32, %arg1: i32) -> (i32, i32, i32) {
    %c0_i32 = arith.constant 0 : i32
    %c0_i32_0 = arith.constant 0 : i32
    return %arg0, %c0_i32, %arg1 : i32, i32, i32
  }
  func.func @transform_1(%arg0: i32, %arg1: i32) -> (i32, i32) {
    %c0_i32 = arith.constant 0 : i32
    %c0_i32_0 = arith.constant 0 : i32
    %c0_i32_1 = arith.constant 0 : i32
    return %c0_i32, %c0_i32_0 : i32, i32
  }
  func.func @transform_2(%arg0: i32, %arg1: i32) -> (i32, i32) {
    %c0_i32 = arith.constant 0 : i32
    %c0_i32_0 = arith.constant 0 : i32
    %c0_i32_1 = arith.constant 0 : i32
    return %c0_i32, %c0_i32_0 : i32, i32
  }
  func.func @transform_3(%arg0: i32, %arg1: i32) -> (i32, i32, i32) {
    %c0_i32 = arith.constant 0 : i32
    %c0_i32_0 = arith.constant 0 : i32
    return %arg0, %c0_i32, %arg1 : i32, i32, i32
  }
}

module attributes {stable_mosaic.version = 11 : i64} {
  func.func @_conv_mm_kernel(%arg0: i32, %arg1: i32, %arg2: memref<1x72x16xbf16, #tpu.memory_space<vmem>>, %arg3: memref<16x72xbf16, #tpu.memory_space<vmem>>, %arg4: memref<16x1xf32, #tpu.memory_space<vmem>>, %arg5: memref<1x16x16xbf16, #tpu.memory_space<vmem>>) attributes {dimension_semantics = [#tpu.dimension_semantics<parallel>, #tpu.dimension_semantics<parallel>], iteration_bounds = array<i64: 2, 1>, scalar_prefetch = 0 : i64, scratch_operands = 0 : i64, tpu.core_type = #tpu.core_type<tc>, window_params = [{transform_indices = @transform_0, window_bounds = array<i64: 1, 72, 16>}, {pipeline_mode = #tpu.pipeline_mode<synchronous>, transform_indices = @transform_1, window_bounds = array<i64: 16, 72>}, {pipeline_mode = #tpu.pipeline_mode<synchronous>, transform_indices = @transform_2, window_bounds = array<i64: 16, 1>}, {transform_indices = @transform_3, window_bounds = array<i64: 1, 16, 16>}]} {
    %c0 = arith.constant 0 : index
    %c0_0 = arith.constant 0 : index
    %0 = vector.load %arg3[%c0, %c0_0] : memref<16x72xbf16, #tpu.memory_space<vmem>>, vector<16x72xbf16>
    %c0_1 = arith.constant 0 : index
    %c0_2 = arith.constant 0 : index
    %c0_3 = arith.constant 0 : index
    %1 = vector.load %arg2[%c0_1, %c0_2, %c0_3] : memref<1x72x16xbf16, #tpu.memory_space<vmem>>, vector<1x72x16xbf16>
    %2 = vector.shape_cast %1 : vector<1x72x16xbf16> to vector<72x16xbf16>
    %cst = arith.constant dense<0.000000e+00> : vector<16x16xf32>
    %3 = tpu.matmul %0, %2, %cst {dimension_numbers = #tpu.dot_dimension_numbers<[1], [0], [0], [1], [0, 0, 1, 1], [], []>} : vector<16x72xbf16>, vector<72x16xbf16>, vector<16x16xf32> -> vector<16x16xf32>
    %c0_4 = arith.constant 0 : index
    %c0_5 = arith.constant 0 : index
    %4 = vector.load %arg4[%c0_4, %c0_5] : memref<16x1xf32, #tpu.memory_space<vmem>>, vector<16x1xf32>
    %5 = vector.broadcast %4 : vector<16x1xf32> to vector<16x16xf32>
    %6 = arith.addf %3, %5 : vector<16x16xf32>
    %cst_6 = arith.constant 0.000000e+00 : f32
    %7 = vector.broadcast %cst_6 : f32 to vector<16x16xf32>
    %8 = arith.maximumf %6, %7 : vector<16x16xf32>
    %9 = arith.truncf %8 : vector<16x16xf32> to vector<16x16xbf16>
    %c0_7 = arith.constant 0 : index
    %c0_8 = arith.constant 0 : index
    %c0_9 = arith.constant 0 : index
    %10 = vector.load %arg5[%c0_7, %c0_8, %c0_9] : memref<1x16x16xbf16, #tpu.memory_space<vmem>>, vector<1x16x16xbf16>
    %11 = vector.shape_cast %10 : vector<1x16x16xbf16> to vector<16x16xbf16>
    %12 = vector.shape_cast %9 : vector<16x16xbf16> to vector<1x16x16xbf16>
    tpu.vector_store %arg5[%c0_7, %c0_8, %c0_9], %12 {strides = array<i32>} : memref<1x16x16xbf16, #tpu.memory_space<vmem>>, vector<1x16x16xbf16>,
    return
  }
  func.func @transform_0(%arg0: i32, %arg1: i32) -> (i32, i32, i32) {
    %c0_i32 = arith.constant 0 : i32
    %c0_i32_0 = arith.constant 0 : i32
    return %arg0, %c0_i32, %arg1 : i32, i32, i32
  }
  func.func @transform_1(%arg0: i32, %arg1: i32) -> (i32, i32) {
    %c0_i32 = arith.constant 0 : i32
    %c0_i32_0 = arith.constant 0 : i32
    %c0_i32_1 = arith.constant 0 : i32
    return %c0_i32, %c0_i32_0 : i32, i32
  }
  func.func @transform_2(%arg0: i32, %arg1: i32) -> (i32, i32) {
    %c0_i32 = arith.constant 0 : i32
    %c0_i32_0 = arith.constant 0 : i32
    %c0_i32_1 = arith.constant 0 : i32
    return %c0_i32, %c0_i32_0 : i32, i32
  }
  func.func @transform_3(%arg0: i32, %arg1: i32) -> (i32, i32, i32) {
    %c0_i32 = arith.constant 0 : i32
    %c0_i32_0 = arith.constant 0 : i32
    return %arg0, %c0_i32, %arg1 : i32, i32, i32
  }
}

module attributes {stable_mosaic.version = 11 : i64} {
  func.func @_conv_mm_kernel(%arg0: i32, %arg1: i32, %arg2: memref<1x144x4xbf16, #tpu.memory_space<vmem>>, %arg3: memref<32x144xbf16, #tpu.memory_space<vmem>>, %arg4: memref<32x1xf32, #tpu.memory_space<vmem>>, %arg5: memref<1x32x4xbf16, #tpu.memory_space<vmem>>) attributes {dimension_semantics = [#tpu.dimension_semantics<parallel>, #tpu.dimension_semantics<parallel>], iteration_bounds = array<i64: 2, 1>, scalar_prefetch = 0 : i64, scratch_operands = 0 : i64, tpu.core_type = #tpu.core_type<tc>, window_params = [{transform_indices = @transform_0, window_bounds = array<i64: 1, 144, 4>}, {pipeline_mode = #tpu.pipeline_mode<synchronous>, transform_indices = @transform_1, window_bounds = array<i64: 32, 144>}, {pipeline_mode = #tpu.pipeline_mode<synchronous>, transform_indices = @transform_2, window_bounds = array<i64: 32, 1>}, {transform_indices = @transform_3, window_bounds = array<i64: 1, 32, 4>}]} {
    %c0 = arith.constant 0 : index
    %c0_0 = arith.constant 0 : index
    %0 = vector.load %arg3[%c0, %c0_0] : memref<32x144xbf16, #tpu.memory_space<vmem>>, vector<32x144xbf16>
    %c0_1 = arith.constant 0 : index
    %c0_2 = arith.constant 0 : index
    %c0_3 = arith.constant 0 : index
    %1 = vector.load %arg2[%c0_1, %c0_2, %c0_3] : memref<1x144x4xbf16, #tpu.memory_space<vmem>>, vector<1x144x4xbf16>
    %2 = vector.shape_cast %1 : vector<1x144x4xbf16> to vector<144x4xbf16>
    %cst = arith.constant dense<0.000000e+00> : vector<32x4xf32>
    %3 = tpu.matmul %0, %2, %cst {dimension_numbers = #tpu.dot_dimension_numbers<[1], [0], [0], [1], [0, 0, 1, 1], [], []>} : vector<32x144xbf16>, vector<144x4xbf16>, vector<32x4xf32> -> vector<32x4xf32>
    %c0_4 = arith.constant 0 : index
    %c0_5 = arith.constant 0 : index
    %4 = vector.load %arg4[%c0_4, %c0_5] : memref<32x1xf32, #tpu.memory_space<vmem>>, vector<32x1xf32>
    %5 = vector.broadcast %4 : vector<32x1xf32> to vector<32x4xf32>
    %6 = arith.addf %3, %5 : vector<32x4xf32>
    %cst_6 = arith.constant 0.000000e+00 : f32
    %7 = vector.broadcast %cst_6 : f32 to vector<32x4xf32>
    %8 = arith.maximumf %6, %7 : vector<32x4xf32>
    %9 = arith.truncf %8 : vector<32x4xf32> to vector<32x4xbf16>
    %c0_7 = arith.constant 0 : index
    %c0_8 = arith.constant 0 : index
    %c0_9 = arith.constant 0 : index
    %10 = vector.load %arg5[%c0_7, %c0_8, %c0_9] : memref<1x32x4xbf16, #tpu.memory_space<vmem>>, vector<1x32x4xbf16>
    %11 = vector.shape_cast %10 : vector<1x32x4xbf16> to vector<32x4xbf16>
    %12 = vector.shape_cast %9 : vector<32x4xbf16> to vector<1x32x4xbf16>
    tpu.vector_store %arg5[%c0_7, %c0_8, %c0_9], %12 {strides = array<i32>} : memref<1x32x4xbf16, #tpu.memory_space<vmem>>, vector<1x32x4xbf16>,
    return
  }
  func.func @transform_0(%arg0: i32, %arg1: i32) -> (i32, i32, i32) {
    %c0_i32 = arith.constant 0 : i32
    %c0_i32_0 = arith.constant 0 : i32
    return %arg0, %c0_i32, %arg1 : i32, i32, i32
  }
  func.func @transform_1(%arg0: i32, %arg1: i32) -> (i32, i32) {
    %c0_i32 = arith.constant 0 : i32
    %c0_i32_0 = arith.constant 0 : i32
    %c0_i32_1 = arith.constant 0 : i32
    return %c0_i32, %c0_i32_0 : i32, i32
  }
  func.func @transform_2(%arg0: i32, %arg1: i32) -> (i32, i32) {
    %c0_i32 = arith.constant 0 : i32
    %c0_i32_0 = arith.constant 0 : i32
    %c0_i32_1 = arith.constant 0 : i32
    return %c0_i32, %c0_i32_0 : i32, i32
  }
  func.func @transform_3(%arg0: i32, %arg1: i32) -> (i32, i32, i32) {
    %c0_i32 = arith.constant 0 : i32
    %c0_i32_0 = arith.constant 0 : i32
    return %arg0, %c0_i32, %arg1 : i32, i32, i32
  }
}

module attributes {stable_mosaic.version = 11 : i64} {
  func.func @_aspp_head_kernel(%arg0: i32, %arg1: i32, %arg2: memref<1x32x4xbf16, #tpu.memory_space<vmem>>, %arg3: memref<1x32x4xbf16, #tpu.memory_space<vmem>>, %arg4: memref<1x32x4xbf16, #tpu.memory_space<vmem>>, %arg5: memref<1x32x4xbf16, #tpu.memory_space<vmem>>, %arg6: memref<16x32xbf16, #tpu.memory_space<vmem>>, %arg7: memref<16x32xbf16, #tpu.memory_space<vmem>>, %arg8: memref<16x32xbf16, #tpu.memory_space<vmem>>, %arg9: memref<16x32xbf16, #tpu.memory_space<vmem>>, %arg10: memref<64x1xf32, #tpu.memory_space<vmem>>, %arg11: memref<16x64xbf16, #tpu.memory_space<vmem>>, %arg12: memref<1x16x1xf32, #tpu.memory_space<vmem>>, %arg13: memref<1x16x4xbf16, #tpu.memory_space<vmem>>) attributes {dimension_semantics = [#tpu.dimension_semantics<parallel>, #tpu.dimension_semantics<parallel>], iteration_bounds = array<i64: 2, 1>, scalar_prefetch = 0 : i64, scratch_operands = 0 : i64, tpu.core_type = #tpu.core_type<tc>, window_params = [{transform_indices = @transform_0, window_bounds = array<i64: 1, 32, 4>}, {transform_indices = @transform_1, window_bounds = array<i64: 1, 32, 4>}, {transform_indices = @transform_2, window_bounds = array<i64: 1, 32, 4>}, {transform_indices = @transform_3, window_bounds = array<i64: 1, 32, 4>}, {pipeline_mode = #tpu.pipeline_mode<synchronous>, transform_indices = @transform_4, window_bounds = array<i64: 16, 32>}, {pipeline_mode = #tpu.pipeline_mode<synchronous>, transform_indices = @transform_5, window_bounds = array<i64: 16, 32>}, {pipeline_mode = #tpu.pipeline_mode<synchronous>, transform_indices = @transform_6, window_bounds = array<i64: 16, 32>}, {pipeline_mode = #tpu.pipeline_mode<synchronous>, transform_indices = @transform_7, window_bounds = array<i64: 16, 32>}, {pipeline_mode = #tpu.pipeline_mode<synchronous>, transform_indices = @transform_8, window_bounds = array<i64: 64, 1>}, {pipeline_mode = #tpu.pipeline_mode<synchronous>, transform_indices = @transform_9, window_bounds = array<i64: 16, 64>}, {transform_indices = @transform_10, window_bounds = array<i64: 1, 16, 1>}, {transform_indices = @transform_11, window_bounds = array<i64: 1, 16, 4>}]} {
    %c0 = arith.constant 0 : index
    %c0_0 = arith.constant 0 : index
    %0 = vector.load %arg6[%c0, %c0_0] : memref<16x32xbf16, #tpu.memory_space<vmem>>, vector<16x32xbf16>
    %c0_1 = arith.constant 0 : index
    %c0_2 = arith.constant 0 : index
    %c0_3 = arith.constant 0 : index
    %1 = vector.load %arg2[%c0_1, %c0_2, %c0_3] : memref<1x32x4xbf16, #tpu.memory_space<vmem>>, vector<1x32x4xbf16>
    %2 = vector.shape_cast %1 : vector<1x32x4xbf16> to vector<32x4xbf16>
    %cst = arith.constant dense<0.000000e+00> : vector<16x4xf32>
    %3 = tpu.matmul %0, %2, %cst {dimension_numbers = #tpu.dot_dimension_numbers<[1], [0], [0], [1], [0, 0, 1, 1], [], []>} : vector<16x32xbf16>, vector<32x4xbf16>, vector<16x4xf32> -> vector<16x4xf32>
    %c0_4 = arith.constant 0 : index
    %c0_5 = arith.constant 0 : index
    %4 = vector.load %arg10[%c0_4, %c0_5] : memref<64x1xf32, #tpu.memory_space<vmem>>, vector<16x1xf32>
    %5 = vector.broadcast %4 : vector<16x1xf32> to vector<16x4xf32>
    %6 = arith.addf %3, %5 : vector<16x4xf32>
    %cst_6 = arith.constant 0.000000e+00 : f32
    %7 = vector.broadcast %cst_6 : f32 to vector<16x4xf32>
    %8 = arith.maximumf %6, %7 : vector<16x4xf32>
    %9 = arith.truncf %8 : vector<16x4xf32> to vector<16x4xbf16>
    %c0_7 = arith.constant 0 : index
    %c0_8 = arith.constant 0 : index
    %10 = vector.load %arg7[%c0_7, %c0_8] : memref<16x32xbf16, #tpu.memory_space<vmem>>, vector<16x32xbf16>
    %c0_9 = arith.constant 0 : index
    %c0_10 = arith.constant 0 : index
    %c0_11 = arith.constant 0 : index
    %11 = vector.load %arg3[%c0_9, %c0_10, %c0_11] : memref<1x32x4xbf16, #tpu.memory_space<vmem>>, vector<1x32x4xbf16>
    %12 = vector.shape_cast %11 : vector<1x32x4xbf16> to vector<32x4xbf16>
    %cst_12 = arith.constant dense<0.000000e+00> : vector<16x4xf32>
    %13 = tpu.matmul %10, %12, %cst_12 {dimension_numbers = #tpu.dot_dimension_numbers<[1], [0], [0], [1], [0, 0, 1, 1], [], []>} : vector<16x32xbf16>, vector<32x4xbf16>, vector<16x4xf32> -> vector<16x4xf32>
    %c16 = arith.constant 16 : index
    %c0_13 = arith.constant 0 : index
    %14 = vector.load %arg10[%c16, %c0_13] : memref<64x1xf32, #tpu.memory_space<vmem>>, vector<16x1xf32>
    %15 = vector.broadcast %14 : vector<16x1xf32> to vector<16x4xf32>
    %16 = arith.addf %13, %15 : vector<16x4xf32>
    %cst_14 = arith.constant 0.000000e+00 : f32
    %17 = vector.broadcast %cst_14 : f32 to vector<16x4xf32>
    %18 = arith.maximumf %16, %17 : vector<16x4xf32>
    %19 = arith.truncf %18 : vector<16x4xf32> to vector<16x4xbf16>
    %c0_15 = arith.constant 0 : index
    %c0_16 = arith.constant 0 : index
    %20 = vector.load %arg8[%c0_15, %c0_16] : memref<16x32xbf16, #tpu.memory_space<vmem>>, vector<16x32xbf16>
    %c0_17 = arith.constant 0 : index
    %c0_18 = arith.constant 0 : index
    %c0_19 = arith.constant 0 : index
    %21 = vector.load %arg4[%c0_17, %c0_18, %c0_19] : memref<1x32x4xbf16, #tpu.memory_space<vmem>>, vector<1x32x4xbf16>
    %22 = vector.shape_cast %21 : vector<1x32x4xbf16> to vector<32x4xbf16>
    %cst_20 = arith.constant dense<0.000000e+00> : vector<16x4xf32>
    %23 = tpu.matmul %20, %22, %cst_20 {dimension_numbers = #tpu.dot_dimension_numbers<[1], [0], [0], [1], [0, 0, 1, 1], [], []>} : vector<16x32xbf16>, vector<32x4xbf16>, vector<16x4xf32> -> vector<16x4xf32>
    %c32 = arith.constant 32 : index
    %c0_21 = arith.constant 0 : index
    %24 = vector.load %arg10[%c32, %c0_21] : memref<64x1xf32, #tpu.memory_space<vmem>>, vector<16x1xf32>
    %25 = vector.broadcast %24 : vector<16x1xf32> to vector<16x4xf32>
    %26 = arith.addf %23, %25 : vector<16x4xf32>
    %cst_22 = arith.constant 0.000000e+00 : f32
    %27 = vector.broadcast %cst_22 : f32 to vector<16x4xf32>
    %28 = arith.maximumf %26, %27 : vector<16x4xf32>
    %29 = arith.truncf %28 : vector<16x4xf32> to vector<16x4xbf16>
    %c0_23 = arith.constant 0 : index
    %c0_24 = arith.constant 0 : index
    %30 = vector.load %arg9[%c0_23, %c0_24] : memref<16x32xbf16, #tpu.memory_space<vmem>>, vector<16x32xbf16>
    %c0_25 = arith.constant 0 : index
    %c0_26 = arith.constant 0 : index
    %c0_27 = arith.constant 0 : index
    %31 = vector.load %arg5[%c0_25, %c0_26, %c0_27] : memref<1x32x4xbf16, #tpu.memory_space<vmem>>, vector<1x32x4xbf16>
    %32 = vector.shape_cast %31 : vector<1x32x4xbf16> to vector<32x4xbf16>
    %cst_28 = arith.constant dense<0.000000e+00> : vector<16x4xf32>
    %33 = tpu.matmul %30, %32, %cst_28 {dimension_numbers = #tpu.dot_dimension_numbers<[1], [0], [0], [1], [0, 0, 1, 1], [], []>} : vector<16x32xbf16>, vector<32x4xbf16>, vector<16x4xf32> -> vector<16x4xf32>
    %c48 = arith.constant 48 : index
    %c0_29 = arith.constant 0 : index
    %34 = vector.load %arg10[%c48, %c0_29] : memref<64x1xf32, #tpu.memory_space<vmem>>, vector<16x1xf32>
    %35 = vector.broadcast %34 : vector<16x1xf32> to vector<16x4xf32>
    %36 = arith.addf %33, %35 : vector<16x4xf32>
    %cst_30 = arith.constant 0.000000e+00 : f32
    %37 = vector.broadcast %cst_30 : f32 to vector<16x4xf32>
    %38 = arith.maximumf %36, %37 : vector<16x4xf32>
    %39 = arith.truncf %38 : vector<16x4xf32> to vector<16x4xbf16>
    %40 = tpu.concatenate %9, %19, %29, %39 in 0 : vector<16x4xbf16>, vector<16x4xbf16>, vector<16x4xbf16>, vector<16x4xbf16> -> vector<64x4xbf16>
    %c0_31 = arith.constant 0 : index
    %c0_32 = arith.constant 0 : index
    %41 = vector.load %arg11[%c0_31, %c0_32] : memref<16x64xbf16, #tpu.memory_space<vmem>>, vector<16x64xbf16>
    %cst_33 = arith.constant dense<0.000000e+00> : vector<16x4xf32>
    %42 = tpu.matmul %41, %40, %cst_33 {dimension_numbers = #tpu.dot_dimension_numbers<[1], [0], [0], [1], [0, 0, 1, 1], [], []>} : vector<16x64xbf16>, vector<64x4xbf16>, vector<16x4xf32> -> vector<16x4xf32>
    %c0_34 = arith.constant 0 : index
    %c0_35 = arith.constant 0 : index
    %c0_36 = arith.constant 0 : index
    %43 = vector.load %arg12[%c0_34, %c0_35, %c0_36] : memref<1x16x1xf32, #tpu.memory_space<vmem>>, vector<1x16x1xf32>
    %44 = vector.shape_cast %43 : vector<1x16x1xf32> to vector<16x1xf32>
    %45 = vector.broadcast %44 : vector<16x1xf32> to vector<16x4xf32>
    %46 = arith.addf %42, %45 : vector<16x4xf32>
    %cst_37 = arith.constant 0.000000e+00 : f32
    %47 = vector.broadcast %cst_37 : f32 to vector<16x4xf32>
    %48 = arith.maximumf %46, %47 : vector<16x4xf32>
    %49 = arith.truncf %48 : vector<16x4xf32> to vector<16x4xbf16>
    %c0_38 = arith.constant 0 : index
    %c0_39 = arith.constant 0 : index
    %c0_40 = arith.constant 0 : index
    %50 = vector.load %arg13[%c0_38, %c0_39, %c0_40] : memref<1x16x4xbf16, #tpu.memory_space<vmem>>, vector<1x16x4xbf16>
    %51 = vector.shape_cast %50 : vector<1x16x4xbf16> to vector<16x4xbf16>
    %52 = vector.shape_cast %49 : vector<16x4xbf16> to vector<1x16x4xbf16>
    tpu.vector_store %arg13[%c0_38, %c0_39, %c0_40], %52 {strides = array<i32>} : memref<1x16x4xbf16, #tpu.memory_space<vmem>>, vector<1x16x4xbf16>,
    return
  }
  func.func @transform_0(%arg0: i32, %arg1: i32) -> (i32, i32, i32) {
    %c0_i32 = arith.constant 0 : i32
    %c0_i32_0 = arith.constant 0 : i32
    return %arg0, %c0_i32, %arg1 : i32, i32, i32
  }
  func.func @transform_1(%arg0: i32, %arg1: i32) -> (i32, i32, i32) {
    %c0_i32 = arith.constant 0 : i32
    %c0_i32_0 = arith.constant 0 : i32
    return %arg0, %c0_i32, %arg1 : i32, i32, i32
  }
  func.func @transform_2(%arg0: i32, %arg1: i32) -> (i32, i32, i32) {
    %c0_i32 = arith.constant 0 : i32
    %c0_i32_0 = arith.constant 0 : i32
    return %arg0, %c0_i32, %arg1 : i32, i32, i32
  }
  func.func @transform_3(%arg0: i32, %arg1: i32) -> (i32, i32, i32) {
    %c0_i32 = arith.constant 0 : i32
    %c0_i32_0 = arith.constant 0 : i32
    return %arg0, %c0_i32, %arg1 : i32, i32, i32
  }
  func.func @transform_4(%arg0: i32, %arg1: i32) -> (i32, i32) {
    %c0_i32 = arith.constant 0 : i32
    %c0_i32_0 = arith.constant 0 : i32
    %c0_i32_1 = arith.constant 0 : i32
    return %c0_i32, %c0_i32_0 : i32, i32
  }
  func.func @transform_5(%arg0: i32, %arg1: i32) -> (i32, i32) {
    %c0_i32 = arith.constant 0 : i32
    %c0_i32_0 = arith.constant 0 : i32
    %c0_i32_1 = arith.constant 0 : i32
    return %c0_i32, %c0_i32_0 : i32, i32
  }
  func.func @transform_6(%arg0: i32, %arg1: i32) -> (i32, i32) {
    %c0_i32 = arith.constant 0 : i32
    %c0_i32_0 = arith.constant 0 : i32
    %c0_i32_1 = arith.constant 0 : i32
    return %c0_i32, %c0_i32_0 : i32, i32
  }
  func.func @transform_7(%arg0: i32, %arg1: i32) -> (i32, i32) {
    %c0_i32 = arith.constant 0 : i32
    %c0_i32_0 = arith.constant 0 : i32
    %c0_i32_1 = arith.constant 0 : i32
    return %c0_i32, %c0_i32_0 : i32, i32
  }
  func.func @transform_8(%arg0: i32, %arg1: i32) -> (i32, i32) {
    %c0_i32 = arith.constant 0 : i32
    %c0_i32_0 = arith.constant 0 : i32
    %c0_i32_1 = arith.constant 0 : i32
    return %c0_i32, %c0_i32_0 : i32, i32
  }
  func.func @transform_9(%arg0: i32, %arg1: i32) -> (i32, i32) {
    %c0_i32 = arith.constant 0 : i32
    %c0_i32_0 = arith.constant 0 : i32
    %c0_i32_1 = arith.constant 0 : i32
    return %c0_i32, %c0_i32_0 : i32, i32
  }
  func.func @transform_10(%arg0: i32, %arg1: i32) -> (i32, i32, i32) {
    %c0_i32 = arith.constant 0 : i32
    %c0_i32_0 = arith.constant 0 : i32
    %c0_i32_1 = arith.constant 0 : i32
    return %arg0, %c0_i32, %c0_i32_0 : i32, i32, i32
  }
  func.func @transform_11(%arg0: i32, %arg1: i32) -> (i32, i32, i32) {
    %c0_i32 = arith.constant 0 : i32
    %c0_i32_0 = arith.constant 0 : i32
    return %arg0, %c0_i32, %arg1 : i32, i32, i32
  }
}

</mosaic_0001>

<llo_original>
// kernel: deeplab_forward.4
$region0: #{deeplab_forward.4}
  #allocation0 [shape = 'u32[]', space=smem, size = 0x4, offset = 0x4, fixed_abs, tag = 'smem constant byte address 0x4 - core index']
  #allocation1 [shape = 'u32[144,128]{1,0:T(1,128)}', space=vmem, size = 0x12000, scoped, tag = 'internal scratch']
  %s0 = inlined_call_operand.vmem [shape: bf16[2,27,64], index: 0, kind: input, shape index: {}]
  %s1 = inlined_call_operand.vmem [shape: bf16[8,27], index: 1, kind: input, shape index: {}]
  %s2 = inlined_call_operand.vmem [shape: f32[8,1], index: 2, kind: input, shape index: {}]
  %s3 = inlined_call_operand.vmem [shape: bf16[2,8,64], index: 3, kind: output, shape index: {}]
  %s4 = sld [smem:[#allocation0]]
  $region45: #{deeplab_forward.4} parent=0
    _
  %s6 = ssub.s32 1, %s4
  %s7 = scalar_select 0, %s6, %s4
  loop: start=0, step=1, limit=4
  $region2: #{deeplab_forward.4} parent=0 // loop_pre_header
    _
  $region3: #{deeplab_forward.4} parent=0 // loop_header
    %s9 = sphi 0, %s13
    %p10 = scmp.ge.s32.totalorder %s9, 4
    %s16 = sphi 0, %s28
    %s17 = sphi 0, %s24
    %s18 = sphi 0, %s16
    %s19 = sphi 0, %s17
    %s20 = sphi 0, %s18
    %s21 = sphi 0, %s19
    %s33 = sphi 0, %s35
    %s36 = sphi 0, %s33
    %s37 = sphi 0, %s36
    %s53 = sphi 0, %s37
    %s57 = sphi 0, %s57
    %s59 = sphi 0, %s57
    %s60 = sphi 0, %s59
    %s74 = sphi 0, %s60
    %s78 = sphi 0, %s78
    %s80 = sphi 0, %s78
    %s81 = sphi 0, %s80
    %s95 = sphi 0, %s81
    %s103 = sphi 0, %s105
    %s106 = sphi 0, %s103
    %s107 = sphi 0, %s106
    %s123 = sphi 0, %s107
  $region4: #{deeplab_forward.4} parent=0 // loop_header_branch
    %12 = sbr.rel (%p10) target = $region8
  $region5: #{deeplab_forward.4} parent=0 // loop_body
    %s14 = ssub.s32 %s9, 1
    %s15 = ssub.s32 %s9, 2
    %s22 = sadd.s32 1, %s17
    %p23 = scmp.ge.s32.totalorder %s22, 1
    %s24 = scalar_select %p23, 0, %s22
    %s25 = sadd.s32 1, %s16
    %s26 = scalar_select %p23, %s25, %s16
    %p27 = scmp.ge.s32.totalorder %s26, 2
    %s28 = scalar_select %p27, 0, %s26
    %s29 = ssub.s32 %s16, %s28
    %s30 = ssub.s32 %s17, %s24
    %s31 = sor.u32 %s29, %s30
    %p32 = scmp.eq.s32.totalorder %s31, 0
    %s34 = sadd.s32 %s33, 1
    %s35 = scalar_select %p32, %s33, %s34
    %p38 = pneg %p32
    %p39 = scmp.eq.s32.totalorder %s9, 1
    %p40 = por %p38, %p39
    %p41 = scmp.ne.s32.totalorder %s33, %s36
    %p42 = scmp.eq.s32.totalorder %s9, 0
    %p43 = por %p41, %p42
    %p44 = scmp.ne.s32.totalorder %s33, %s36
    %p45 = scmp.eq.s32.totalorder %s14, 1
    %p46 = por %p44, %p45
    %p47 = scmp.ne.s32.totalorder %s36, %s37
    %p48 = scmp.eq.s32.totalorder %s14, 0
    %p49 = por %p47, %p48
    %p50 = scmp.ne.s32.totalorder %s36, %s37
    %p51 = scmp.eq.s32.totalorder %s15, 1
    %p52 = por %p50, %p51
    %p54 = scmp.ne.s32.totalorder %s37, %s53
    %p55 = scmp.eq.s32.totalorder %s15, 0
    %p56 = por %p54, %p55
    %s58 = sadd.s32 %s57, 1
    %p61 = scmp.eq.s32.totalorder %s9, 1
    %p62 = scmp.ne.s32.totalorder %s57, %s59
    %p63 = scmp.eq.s32.totalorder %s9, 0
    %p64 = por %p62, %p63
    %p65 = scmp.ne.s32.totalorder %s57, %s59
    %p66 = scmp.eq.s32.totalorder %s14, 1
    %p67 = por %p65, %p66
    %p68 = scmp.ne.s32.totalorder %s59, %s60
    %p69 = scmp.eq.s32.totalorder %s14, 0
    %p70 = por %p68, %p69
    %p71 = scmp.ne.s32.totalorder %s59, %s60
    %p72 = scmp.eq.s32.totalorder %s15, 1
    %p73 = por %p71, %p72
    %p75 = scmp.ne.s32.totalorder %s60, %s74
    %p76 = scmp.eq.s32.totalorder %s15, 0
    %p77 = por %p75, %p76
    %s79 = sadd.s32 %s78, 1
    %p82 = scmp.eq.s32.totalorder %s9, 1
    %p83 = scmp.ne.s32.totalorder %s78, %s80
    %p84 = scmp.eq.s32.totalorder %s9, 0
    %p85 = por %p83, %p84
    %p86 = scmp.ne.s32.totalorder %s78, %s80
    %p87 = scmp.eq.s32.totalorder %s14, 1
    %p88 = por %p86, %p87
    %p89 = scmp.ne.s32.totalorder %s80, %s81
    %p90 = scmp.eq.s32.totalorder %s14, 0
    %p91 = por %p89, %p90
    %p92 = scmp.ne.s32.totalorder %s80, %s81
    %p93 = scmp.eq.s32.totalorder %s15, 1
    %p94 = por %p92, %p93
    %p96 = scmp.ne.s32.totalorder %s81, %s95
    %p97 = scmp.eq.s32.totalorder %s15, 0
    %p98 = por %p96, %p97
    %s99 = ssub.s32 %s16, %s28
    %s100 = ssub.s32 %s17, %s24
    %s101 = sor.u32 %s99, %s100
    %p102 = scmp.eq.s32.totalorder %s101, 0
    %s104 = sadd.s32 %s103, 1
    %s105 = scalar_select %p102, %s103, %s104
    %p108 = pneg %p102
    %p109 = scmp.eq.s32.totalorder %s9, 1
    %p110 = por %p108, %p109
    %p111 = scmp.ne.s32.totalorder %s103, %s106
    %p112 = scmp.eq.s32.totalorder %s9, 0
    %p113 = por %p111, %p112
    %p114 = scmp.ne.s32.totalorder %s103, %s106
    %p115 = scmp.eq.s32.totalorder %s14, 1
    %p116 = por %p114, %p115
    %p117 = scmp.ne.s32.totalorder %s106, %s107
    %p118 = scmp.eq.s32.totalorder %s14, 0
    %p119 = por %p117, %p118
    %p120 = scmp.ne.s32.totalorder %s106, %s107
    %p121 = scmp.eq.s32.totalorder %s15, 1
    %p122 = por %p120, %p121
    %p124 = scmp.ne.s32.totalorder %s107, %s123
    %p125 = scmp.eq.s32.totalorder %s15, 0
    %p126 = por %p124, %p125
    %p127 = scmp.le.s32.totalorder 1, %s9
    %p128 = scmp.lt.s32.totalorder %s9, 3
    %p129 = pnand %p127, %p128
    %p130 = pneg %p129
    // Predicated region
    $region9: #{deeplab_forward.4} parent=5 // pred_check
      _
    $region10: #{deeplab_forward.4} parent=5 // pred_check_branch
      %132 = sbr.rel (%p129) target = $region12
    $region11: #{deeplab_forward.4} parent=5 // pred_region
      %s133 = ssub.s32 %s9, 1
      // Predicated region
      $region13: #{deeplab_forward.4} parent=11 // pred_check
        %p134 = pneg %p70
      $region14: #{deeplab_forward.4} parent=11 // pred_check_branch
        %136 = sbr.rel (%p134) target = $region16
      $region15: #{deeplab_forward.4} parent=11 // pred_region
        _
      $region16: #{deeplab_forward.4} parent=11 // pred_fallthru
        _
      // Predicated region
      $region17: #{deeplab_forward.4} parent=11 // pred_check
        %p137 = pneg %p91
      $region18: #{deeplab_forward.4} parent=11 // pred_check_branch
        %139 = sbr.rel (%p137) target = $region20
      $region19: #{deeplab_forward.4} parent=11 // pred_region
        _
      $region20: #{deeplab_forward.4} parent=11 // pred_fallthru
        _
    $region12: #{deeplab_forward.4} parent=5 // pred_fallthru
      _
    %p140 = scmp.lt.s32.totalorder %s9, 2
    // Predicated region
    $region21: #{deeplab_forward.4} parent=5 // pred_check
      %p141 = pneg %p140
    $region22: #{deeplab_forward.4} parent=5 // pred_check_branch
      %143 = sbr.rel (%p141) target = $region24
    $region23: #{deeplab_forward.4} parent=5 // pred_region
      // Predicated region
      $region25: #{deeplab_forward.4} parent=23 // pred_check
        %p144 = pneg %p43
      $region26: #{deeplab_forward.4} parent=23 // pred_check_branch
        %146 = sbr.rel (%p144) target = $region28
      $region27: #{deeplab_forward.4} parent=23 // pred_region
        %p147 = scmp.lt.s32.totalorder %s16, 1
        %s148 = scalar_select %p147, %s16, 1
        %p149 = scmp.lt.s32.totalorder %s17, 0
        %s150 = scalar_select %p149, %s17, 0
        %s151 = smul.addr %s148, 4
        %s152 = sadd.s32 %s150, %s151
        %s153 = smul.addr %s152, 4
        %s154 = scalar_lea.vmem %s0, %s153
      $region28: #{deeplab_forward.4} parent=23 // pred_fallthru
        _
    $region24: #{deeplab_forward.4} parent=5 // pred_fallthru
      _
    %p155 = scmp.le.s32.totalorder 1, %s9
    %p156 = scmp.lt.s32.totalorder %s9, 3
    %p157 = pnand %p155, %p156
    %p158 = pneg %p157
    // Predicated region
    $region29: #{deeplab_forward.4} parent=5 // pred_check
      _
    $region30: #{deeplab_forward.4} parent=5 // pred_check_branch
      %160 = sbr.rel (%p157) target = $region32
    $region31: #{deeplab_forward.4} parent=5 // pred_region
      %s161 = ssub.s32 %s9, 1
      %p162 = scmp.lt.s32.totalorder %s18, 1
      %s163 = scalar_select %p162, %s18, 1
      %p164 = scmp.lt.s32.totalorder %s19, 0
      %s165 = scalar_select %p164, %s19, 0
      %s166 = smul.addr %s163, 4
      %s167 = sadd.s32 %s165, %s166
      %s168 = smul.addr %s167, 4
      %s169 = scalar_lea.vmem %s0, %s168
      %p170 = pneg %p49
      %p171 = pneg %p46
      %p172 = pneg %p70
      %p173 = pneg %p67
      %p174 = pneg %p91
      %p175 = pneg %p88
      %p176 = pneg %p119
      %p177 = pneg %p116
      %p178 = scmp.lt.s32.totalorder %s18, 1
      %s179 = scalar_select %p178, %s18, 1
      %p180 = scmp.lt.s32.totalorder %s19, 0
      %s181 = scalar_select %p180, %s19, 0
      %s182 = sadd.s32 %s181, %s179
      %s183 = smul.addr %s182, 4
      %s184 = scalar_lea.vmem %s3, %s183
      %p185 = scmp.lt.s32.totalorder %s18, 1
      %s186 = scalar_select %p185, %s18, 1
      %p187 = scmp.lt.s32.totalorder %s19, 0
      %s188 = scalar_select %p187, %s19, 0
      %s189 = smul.addr %s186, 4
      %s190 = sadd.s32 %s188, %s189
      %s191 = smul.addr %s190, 4
      %s192 = scalar_lea.vmem %s0, %s191
      %p193 = scmp.lt.s32.totalorder %s18, 1
      %s194 = scalar_select %p193, %s18, 1
      %p195 = scmp.lt.s32.totalorder %s19, 0
      %s196 = scalar_select %p195, %s19, 0
      %s197 = sadd.s32 %s196, %s194
      %s198 = smul.addr %s197, 4
      %s199 = scalar_lea.vmem %s3, %s198
      %v201 = vld [vmem:[%s1] sm:$0xf]
      %v202 = vld [vmem:[%s192] sm:$0xf]
      %v203 = vld [vmem:[%s192 + $0x4] sm:$0xf]
      %v204 = vld [vmem:[%s192 + $0x8] sm:$0xf]
      %v205 = vld [vmem:[%s192 + $0xc] sm:$0x3]
      %v206 = vld [vmem:[%s2] sm:$0xff]
      %208 = vset.pattern.permute.xlu0 0
      %209 = vperm.xlu0 %208, %v206
      %v210 = vpop.permute.xlu0 %209
      %v216 = vunpack.c.l.b16 %v202
      %v217 = vunpack.c.l.b16 %v203
      %v218 = vunpack.c.l.b16 %v204
      %v219 = vunpack.c.l.b16 %v205
      %v220 = vpack.c.b16 %v217, %v216
      %v221 = vpack.c.b16 %v219, %v218
      %vm223 = vcmask 220160
      %v225 = vsel %vm223, %v201, 0
      %vm227 = vcmask 1044480
      %vm228 = vcmask 1045504
      %v229 = vsel %vm227, 4294967295, 65535
      %v230 = vsel %vm228, %v229, 0
      %v232 = vand.u32 %v221, %v230
      %234 = vmatprep.subr.bf16.mxu0 0
      %235 = vmatpush1.bf16.msra.mxu0 0
      %236 = vmatprep.subr.bf16.mxu0 0
      %237 = vmatpush1.bf16.msra.mxu0 0
      %238 = vmatprep.subr.bf16.mxu0 0
      %239 = vmatpush1.bf16.msra.mxu0 0
      %240 = vmatprep.subr.bf16.mxu0 0
      %241 = vmatpush1.bf16.msra.mxu0 0
      %242 = vmatprep.subr.bf16.mxu0 0
      %243 = vmatpush1.bf16.msra.mxu0 0
      %244 = vmatprep.subr.bf16.mxu0 0
      %245 = vmatpush1.bf16.msra.mxu0 0
      %246 = vmatprep.subr.bf16.mxu0 0
      %247 = vmatpush1.bf16.msra.mxu0 %v232
      %248 = vmatprep.subr.bf16.mxu0 0
      %249 = vmatpush1.bf16.msra.mxu0 %v220
      %250 = vmatprep.subr.bf16.mxu0 0
      %251 = vmatpush2.bf16.msra.mxu0 0
      %252 = vmatprep.subr.bf16.mxu0 0
      %253 = vmatpush2.bf16.msra.mxu0 0
      %254 = vmatprep.subr.bf16.mxu0 0
      %255 = vmatpush2.bf16.msra.mxu0 0
      %256 = vmatprep.subr.bf16.mxu0 0
      %257 = vmatpush2.bf16.msra.mxu0 0
      %258 = vmatprep.subr.bf16.mxu0 0
      %259 = vmatpush2.bf16.msra.mxu0 0
      %260 = vmatprep.subr.bf16.mxu0 0
      %261 = vmatpush2.bf16.msra.mxu0 0
      %262 = vmatprep.subr.bf16.mxu0 0
      %263 = vmatpush2.bf16.msra.mxu0 0
      %264 = vmatprep.subr.bf16.mxu0 0
      %265 = vmatpush2.bf16.msra.mxu0 0
      %266 = vmatprep.mubr.bf16.mxu0 0
      %267 = vmatmul.mubr.bf16.gmra.mxu0 %v225
      %v268 = vpop.f32.mrf.mxu0
      %v269 = vadd.f32 %v210, %v268
      %v270 = vpop.f32.mrf.mxu0
      %v271 = vpop.f32.mrf.mxu0
      %v272 = vpop.f32.mrf.mxu0
      %273 = vdwg.mxu0
      %v274 = vmax.f32 %v269, 0.0
      %v275 = vpack.c.bf16 %v274, %v274
      %vm276 = vcmask 519168
      %277 = vst.msk [vmem:[%s199] sm:$0xf] %vm276, %v275
      %p278 = scmp.lt.s32.totalorder %s18, 1
      %s279 = scalar_select %p278, %s18, 1
      %p280 = scmp.lt.s32.totalorder %s19, 0
      %s281 = scalar_select %p280, %s19, 0
      %s282 = sadd.s32 %s281, %s279
      %s283 = smul.addr %s282, 4
      %s284 = scalar_lea.vmem %s3, %s283
      // Predicated region
      $region33: #{deeplab_forward.4} parent=31 // pred_check
        %p285 = pneg %p116
      $region34: #{deeplab_forward.4} parent=31 // pred_check_branch
        %287 = sbr.rel (%p285) target = $region36
      $region35: #{deeplab_forward.4} parent=31 // pred_region
        _
      $region36: #{deeplab_forward.4} parent=31 // pred_fallthru
        _
    $region32: #{deeplab_forward.4} parent=5 // pred_fallthru
      _
    %p288 = scmp.le.s32.totalorder 2, %s9
    // Predicated region
    $region37: #{deeplab_forward.4} parent=5 // pred_check
      %p289 = pneg %p288
    $region38: #{deeplab_forward.4} parent=5 // pred_check_branch
      %291 = sbr.rel (%p289) target = $region40
    $region39: #{deeplab_forward.4} parent=5 // pred_region
      %s292 = ssub.s32 %s9, 2
      // Predicated region
      $region41: #{deeplab_forward.4} parent=39 // pred_check
        %p293 = pneg %p122
      $region42: #{deeplab_forward.4} parent=39 // pred_check_branch
        %295 = sbr.rel (%p293) target = $region44
      $region43: #{deeplab_forward.4} parent=39 // pred_region
        %p296 = scmp.lt.s32.totalorder %s20, 1
        %s297 = scalar_select %p296, %s20, 1
        %p298 = scmp.lt.s32.totalorder %s21, 0
        %s299 = scalar_select %p298, %s21, 0
        %s300 = sadd.s32 %s299, %s297
        %s301 = smul.addr %s300, 4
        %s302 = scalar_lea.vmem %s3, %s301
      $region44: #{deeplab_forward.4} parent=39 // pred_fallthru
        _
    $region40: #{deeplab_forward.4} parent=5 // pred_fallthru
      _
  $region6: #{deeplab_forward.4} parent=0 // loop_footer
    %s13 = sadd.s32 1, %s9
  $region7: #{deeplab_forward.4} parent=0 // loop_footer_branch
    %8 = sbr.rel target = $region3
  $region8: #{deeplab_forward.4} parent=0 // loop_exit
    _

// kernel: deeplab_forward.5
$region0: #{deeplab_forward.5}
  #allocation0 [shape = 'u32[]', space=smem, size = 0x4, offset = 0x4, fixed_abs, tag = 'smem constant byte address 0x4 - core index']
  #allocation1 [shape = 'u32[144,128]{1,0:T(1,128)}', space=vmem, size = 0x12000, scoped, tag = 'internal scratch']
  %s0 = inlined_call_operand.vmem [shape: bf16[2,72,16], index: 0, kind: input, shape index: {}]
  %s1 = inlined_call_operand.vmem [shape: bf16[16,72], index: 1, kind: input, shape index: {}]
  %s2 = inlined_call_operand.vmem [shape: f32[16,1], index: 2, kind: input, shape index: {}]
  %s3 = inlined_call_operand.vmem [shape: bf16[2,16,16], index: 3, kind: output, shape index: {}]
  %s4 = sld [smem:[#allocation0]]
  $region45: #{deeplab_forward.5} parent=0
    _
  %s6 = ssub.s32 1, %s4
  %s7 = scalar_select 0, %s6, %s4
  loop: start=0, step=1, limit=4
  $region2: #{deeplab_forward.5} parent=0 // loop_pre_header
    _
  $region3: #{deeplab_forward.5} parent=0 // loop_header
    %s9 = sphi 0, %s13
    %p10 = scmp.ge.s32.totalorder %s9, 4
    %s16 = sphi 0, %s28
    %s17 = sphi 0, %s24
    %s18 = sphi 0, %s16
    %s19 = sphi 0, %s17
    %s20 = sphi 0, %s18
    %s21 = sphi 0, %s19
    %s33 = sphi 0, %s35
    %s36 = sphi 0, %s33
    %s37 = sphi 0, %s36
    %s53 = sphi 0, %s37
    %s57 = sphi 0, %s57
    %s59 = sphi 0, %s57
    %s60 = sphi 0, %s59
    %s74 = sphi 0, %s60
    %s78 = sphi 0, %s78
    %s80 = sphi 0, %s78
    %s81 = sphi 0, %s80
    %s95 = sphi 0, %s81
    %s103 = sphi 0, %s105
    %s106 = sphi 0, %s103
    %s107 = sphi 0, %s106
    %s123 = sphi 0, %s107
  $region4: #{deeplab_forward.5} parent=0 // loop_header_branch
    %12 = sbr.rel (%p10) target = $region8
  $region5: #{deeplab_forward.5} parent=0 // loop_body
    %s14 = ssub.s32 %s9, 1
    %s15 = ssub.s32 %s9, 2
    %s22 = sadd.s32 1, %s17
    %p23 = scmp.ge.s32.totalorder %s22, 1
    %s24 = scalar_select %p23, 0, %s22
    %s25 = sadd.s32 1, %s16
    %s26 = scalar_select %p23, %s25, %s16
    %p27 = scmp.ge.s32.totalorder %s26, 2
    %s28 = scalar_select %p27, 0, %s26
    %s29 = ssub.s32 %s16, %s28
    %s30 = ssub.s32 %s17, %s24
    %s31 = sor.u32 %s29, %s30
    %p32 = scmp.eq.s32.totalorder %s31, 0
    %s34 = sadd.s32 %s33, 1
    %s35 = scalar_select %p32, %s33, %s34
    %p38 = pneg %p32
    %p39 = scmp.eq.s32.totalorder %s9, 1
    %p40 = por %p38, %p39
    %p41 = scmp.ne.s32.totalorder %s33, %s36
    %p42 = scmp.eq.s32.totalorder %s9, 0
    %p43 = por %p41, %p42
    %p44 = scmp.ne.s32.totalorder %s33, %s36
    %p45 = scmp.eq.s32.totalorder %s14, 1
    %p46 = por %p44, %p45
    %p47 = scmp.ne.s32.totalorder %s36, %s37
    %p48 = scmp.eq.s32.totalorder %s14, 0
    %p49 = por %p47, %p48
    %p50 = scmp.ne.s32.totalorder %s36, %s37
    %p51 = scmp.eq.s32.totalorder %s15, 1
    %p52 = por %p50, %p51
    %p54 = scmp.ne.s32.totalorder %s37, %s53
    %p55 = scmp.eq.s32.totalorder %s15, 0
    %p56 = por %p54, %p55
    %s58 = sadd.s32 %s57, 1
    %p61 = scmp.eq.s32.totalorder %s9, 1
    %p62 = scmp.ne.s32.totalorder %s57, %s59
    %p63 = scmp.eq.s32.totalorder %s9, 0
    %p64 = por %p62, %p63
    %p65 = scmp.ne.s32.totalorder %s57, %s59
    %p66 = scmp.eq.s32.totalorder %s14, 1
    %p67 = por %p65, %p66
    %p68 = scmp.ne.s32.totalorder %s59, %s60
    %p69 = scmp.eq.s32.totalorder %s14, 0
    %p70 = por %p68, %p69
    %p71 = scmp.ne.s32.totalorder %s59, %s60
    %p72 = scmp.eq.s32.totalorder %s15, 1
    %p73 = por %p71, %p72
    %p75 = scmp.ne.s32.totalorder %s60, %s74
    %p76 = scmp.eq.s32.totalorder %s15, 0
    %p77 = por %p75, %p76
    %s79 = sadd.s32 %s78, 1
    %p82 = scmp.eq.s32.totalorder %s9, 1
    %p83 = scmp.ne.s32.totalorder %s78, %s80
    %p84 = scmp.eq.s32.totalorder %s9, 0
    %p85 = por %p83, %p84
    %p86 = scmp.ne.s32.totalorder %s78, %s80
    %p87 = scmp.eq.s32.totalorder %s14, 1
    %p88 = por %p86, %p87
    %p89 = scmp.ne.s32.totalorder %s80, %s81
    %p90 = scmp.eq.s32.totalorder %s14, 0
    %p91 = por %p89, %p90
    %p92 = scmp.ne.s32.totalorder %s80, %s81
    %p93 = scmp.eq.s32.totalorder %s15, 1
    %p94 = por %p92, %p93
    %p96 = scmp.ne.s32.totalorder %s81, %s95
    %p97 = scmp.eq.s32.totalorder %s15, 0
    %p98 = por %p96, %p97
    %s99 = ssub.s32 %s16, %s28
    %s100 = ssub.s32 %s17, %s24
    %s101 = sor.u32 %s99, %s100
    %p102 = scmp.eq.s32.totalorder %s101, 0
    %s104 = sadd.s32 %s103, 1
    %s105 = scalar_select %p102, %s103, %s104
    %p108 = pneg %p102
    %p109 = scmp.eq.s32.totalorder %s9, 1
    %p110 = por %p108, %p109
    %p111 = scmp.ne.s32.totalorder %s103, %s106
    %p112 = scmp.eq.s32.totalorder %s9, 0
    %p113 = por %p111, %p112
    %p114 = scmp.ne.s32.totalorder %s103, %s106
    %p115 = scmp.eq.s32.totalorder %s14, 1
    %p116 = por %p114, %p115
    %p117 = scmp.ne.s32.totalorder %s106, %s107
    %p118 = scmp.eq.s32.totalorder %s14, 0
    %p119 = por %p117, %p118
    %p120 = scmp.ne.s32.totalorder %s106, %s107
    %p121 = scmp.eq.s32.totalorder %s15, 1
    %p122 = por %p120, %p121
    %p124 = scmp.ne.s32.totalorder %s107, %s123
    %p125 = scmp.eq.s32.totalorder %s15, 0
    %p126 = por %p124, %p125
    %p127 = scmp.le.s32.totalorder 1, %s9
    %p128 = scmp.lt.s32.totalorder %s9, 3
    %p129 = pnand %p127, %p128
    %p130 = pneg %p129
    // Predicated region
    $region9: #{deeplab_forward.5} parent=5 // pred_check
      _
    $region10: #{deeplab_forward.5} parent=5 // pred_check_branch
      %132 = sbr.rel (%p129) target = $region12
    $region11: #{deeplab_forward.5} parent=5 // pred_region
      %s133 = ssub.s32 %s9, 1
      // Predicated region
      $region13: #{deeplab_forward.5} parent=11 // pred_check
        %p134 = pneg %p70
      $region14: #{deeplab_forward.5} parent=11 // pred_check_branch
        %136 = sbr.rel (%p134) target = $region16
      $region15: #{deeplab_forward.5} parent=11 // pred_region
        _
      $region16: #{deeplab_forward.5} parent=11 // pred_fallthru
        _
      // Predicated region
      $region17: #{deeplab_forward.5} parent=11 // pred_check
        %p137 = pneg %p91
      $region18: #{deeplab_forward.5} parent=11 // pred_check_branch
        %139 = sbr.rel (%p137) target = $region20
      $region19: #{deeplab_forward.5} parent=11 // pred_region
        _
      $region20: #{deeplab_forward.5} parent=11 // pred_fallthru
        _
    $region12: #{deeplab_forward.5} parent=5 // pred_fallthru
      _
    %p140 = scmp.lt.s32.totalorder %s9, 2
    // Predicated region
    $region21: #{deeplab_forward.5} parent=5 // pred_check
      %p141 = pneg %p140
    $region22: #{deeplab_forward.5} parent=5 // pred_check_branch
      %143 = sbr.rel (%p141) target = $region24
    $region23: #{deeplab_forward.5} parent=5 // pred_region
      // Predicated region
      $region25: #{deeplab_forward.5} parent=23 // pred_check
        %p144 = pneg %p43
      $region26: #{deeplab_forward.5} parent=23 // pred_check_branch
        %146 = sbr.rel (%p144) target = $region28
      $region27: #{deeplab_forward.5} parent=23 // pred_region
        %p147 = scmp.lt.s32.totalorder %s16, 1
        %s148 = scalar_select %p147, %s16, 1
        %p149 = scmp.lt.s32.totalorder %s17, 0
        %s150 = scalar_select %p149, %s17, 0
        %s151 = smul.addr %s148, 9
        %s152 = sadd.s32 %s150, %s151
        %s153 = smul.addr %s152, 4
        %s154 = scalar_lea.vmem %s0, %s153
      $region28: #{deeplab_forward.5} parent=23 // pred_fallthru
        _
    $region24: #{deeplab_forward.5} parent=5 // pred_fallthru
      _
    %p155 = scmp.le.s32.totalorder 1, %s9
    %p156 = scmp.lt.s32.totalorder %s9, 3
    %p157 = pnand %p155, %p156
    %p158 = pneg %p157
    // Predicated region
    $region29: #{deeplab_forward.5} parent=5 // pred_check
      _
    $region30: #{deeplab_forward.5} parent=5 // pred_check_branch
      %160 = sbr.rel (%p157) target = $region32
    $region31: #{deeplab_forward.5} parent=5 // pred_region
      %s161 = ssub.s32 %s9, 1
      %p162 = scmp.lt.s32.totalorder %s18, 1
      %s163 = scalar_select %p162, %s18, 1
      %p164 = scmp.lt.s32.totalorder %s19, 0
      %s165 = scalar_select %p164, %s19, 0
      %s166 = smul.addr %s163, 9
      %s167 = sadd.s32 %s165, %s166
      %s168 = smul.addr %s167, 4
      %s169 = scalar_lea.vmem %s0, %s168
      %p170 = pneg %p49
      %p171 = pneg %p46
      %p172 = pneg %p70
      %p173 = pneg %p67
      %p174 = pneg %p91
      %p175 = pneg %p88
      %p176 = pneg %p119
      %p177 = pneg %p116
      %p178 = scmp.lt.s32.totalorder %s18, 1
      %s179 = scalar_select %p178, %s18, 1
      %p180 = scmp.lt.s32.totalorder %s19, 0
      %s181 = scalar_select %p180, %s19, 0
      %s182 = smul.addr %s179, 2
      %s183 = sadd.s32 %s181, %s182
      %s184 = smul.addr %s183, 4
      %s185 = scalar_lea.vmem %s3, %s184
      %p186 = scmp.lt.s32.totalorder %s18, 1
      %s187 = scalar_select %p186, %s18, 1
      %p188 = scmp.lt.s32.totalorder %s19, 0
      %s189 = scalar_select %p188, %s19, 0
      %s190 = smul.addr %s187, 9
      %s191 = sadd.s32 %s189, %s190
      %s192 = smul.addr %s191, 4
      %s193 = scalar_lea.vmem %s0, %s192
      %p194 = scmp.lt.s32.totalorder %s18, 1
      %s195 = scalar_select %p194, %s18, 1
      %p196 = scmp.lt.s32.totalorder %s19, 0
      %s197 = scalar_select %p196, %s19, 0
      %s198 = smul.addr %s195, 2
      %s199 = sadd.s32 %s197, %s198
      %s200 = smul.addr %s199, 4
      %s201 = scalar_lea.vmem %s3, %s200
      %v203 = vld [vmem:[%s1] sm:$0xf]
      %v204 = vld [vmem:[%s1 + $0x4] sm:$0xf]
      %v205 = vld [vmem:[%s193] sm:$0xf]
      %v206 = vld [vmem:[%s193 + $0x4] sm:$0xf]
      %v207 = vld [vmem:[%s193 + $0x8] sm:$0xf]
      %v208 = vld [vmem:[%s193 + $0xc] sm:$0xf]
      %v209 = vld [vmem:[%s193 + $0x10] sm:$0xf]
      %v210 = vld [vmem:[%s193 + $0x14] sm:$0xf]
      %v211 = vld [vmem:[%s193 + $0x18] sm:$0xf]
      %v212 = vld [vmem:[%s193 + $0x1c] sm:$0xf]
      %v213 = vld [vmem:[%s193 + $0x20] sm:$0xf]
      %v214 = vld [vmem:[%s2] sm:$0xff]
      %v215 = vld [vmem:[%s2 + $0x8] sm:$0xff]
      %217 = vset.pattern.permute.xlu0 0
      %218 = vperm.xlu0 %217, %v214
      %v219 = vpop.permute.xlu0 %218
      %222 = vset.pattern.permute.xlu0 0
      %223 = vperm.xlu0 %222, %v215
      %v224 = vpop.permute.xlu0 %223
      %v228 = vunpack.c.l.b16 %v203
      %v229 = vunpack.c.l.b16 %v204
      %v230 = vpack.c.b16 %v229, %v228
      %v240 = vunpack.c.l.b16 %v205
      %v241 = vunpack.c.l.b16 %v206
      %v242 = vunpack.c.l.b16 %v207
      %v243 = vunpack.c.l.b16 %v208
      %v244 = vunpack.c.l.b16 %v209
      %v245 = vunpack.c.l.b16 %v210
      %v246 = vunpack.c.l.b16 %v211
      %v247 = vunpack.c.l.b16 %v212
      %v248 = vunpack.c.l.b16 %v213
      %v249 = vpack.c.b16 %v241, %v240
      %v250 = vpack.c.b16 %v243, %v242
      %v251 = vpack.c.b16 %v245, %v244
      %v252 = vpack.c.b16 %v247, %v246
      %v253 = vpack.c.b16 %v248, %v248
      %vm258 = vcmask 588800
      %v260 = vsel %vm258, %v230, 0
      %vm262 = vcmask 1043456
      %v264 = vsel %vm262, %v253, 0
      %266 = vmatprep.subr.bf16.mxu0 0
      %267 = vmatpush1.bf16.msra.mxu0 0
      %268 = vmatprep.subr.bf16.mxu0 0
      %269 = vmatpush1.bf16.msra.mxu0 0
      %270 = vmatprep.subr.bf16.mxu0 0
      %271 = vmatpush1.bf16.msra.mxu0 0
      %272 = vmatprep.subr.bf16.mxu0 0
      %273 = vmatpush1.bf16.msra.mxu0 %v264
      %274 = vmatprep.subr.bf16.mxu0 0
      %275 = vmatpush1.bf16.msra.mxu0 %v252
      %276 = vmatprep.subr.bf16.mxu0 0
      %277 = vmatpush1.bf16.msra.mxu0 %v251
      %278 = vmatprep.subr.bf16.mxu0 0
      %279 = vmatpush1.bf16.msra.mxu0 %v250
      %280 = vmatprep.subr.bf16.mxu0 0
      %281 = vmatpush1.bf16.msra.mxu0 %v249
      %282 = vmatprep.subr.bf16.mxu0 0
      %283 = vmatpush2.bf16.msra.mxu0 0
      %284 = vmatprep.subr.bf16.mxu0 0
      %285 = vmatpush2.bf16.msra.mxu0 0
      %286 = vmatprep.subr.bf16.mxu0 0
      %287 = vmatpush2.bf16.msra.mxu0 0
      %288 = vmatprep.subr.bf16.mxu0 0
      %289 = vmatpush2.bf16.msra.mxu0 0
      %290 = vmatprep.subr.bf16.mxu0 0
      %291 = vmatpush2.bf16.msra.mxu0 0
      %292 = vmatprep.subr.bf16.mxu0 0
      %293 = vmatpush2.bf16.msra.mxu0 0
      %294 = vmatprep.subr.bf16.mxu0 0
      %295 = vmatpush2.bf16.msra.mxu0 0
      %296 = vmatprep.subr.bf16.mxu0 0
      %297 = vmatpush2.bf16.msra.mxu0 0
      %298 = vmatprep.mubr.bf16.mxu0 0
      %299 = vmatmul.mubr.bf16.gmra.mxu0 %v260
      %v300 = vpop.f32.mrf.mxu0
      %v301 = vadd.f32 %v219, %v300
      %v302 = vpop.f32.mrf.mxu0
      %v303 = vpop.f32.mrf.mxu0
      %v304 = vadd.f32 %v224, %v303
      %v305 = vpop.f32.mrf.mxu0
      %306 = vdwg.mxu0
      %v307 = vmax.f32 %v301, 0.0
      %v308 = vmax.f32 %v304, 0.0
      %v309 = vpack.c.bf16 %v308, %v307
      %v311 = vunpack.c.l.b16 %v309
      %v312 = vunpack.c.h.b16 %v309
      %v313 = vpack.c.b16 %v311, %v311
      %v314 = vpack.c.b16 %v312, %v312
      %vm317 = vcmask 125952
      %318 = vst.msk [vmem:[%s201] sm:$0xf] %vm317, %v313
      %319 = vst.msk [vmem:[%s201 + $0x4] sm:$0xf] %vm317, %v314
      %p320 = scmp.lt.s32.totalorder %s18, 1
      %s321 = scalar_select %p320, %s18, 1
      %p322 = scmp.lt.s32.totalorder %s19, 0
      %s323 = scalar_select %p322, %s19, 0
      %s324 = smul.addr %s321, 2
      %s325 = sadd.s32 %s323, %s324
      %s326 = smul.addr %s325, 4
      %s327 = scalar_lea.vmem %s3, %s326
      // Predicated region
      $region33: #{deeplab_forward.5} parent=31 // pred_check
        %p328 = pneg %p116
      $region34: #{deeplab_forward.5} parent=31 // pred_check_branch
        %330 = sbr.rel (%p328) target = $region36
      $region35: #{deeplab_forward.5} parent=31 // pred_region
        _
      $region36: #{deeplab_forward.5} parent=31 // pred_fallthru
        _
    $region32: #{deeplab_forward.5} parent=5 // pred_fallthru
      _
    %p331 = scmp.le.s32.totalorder 2, %s9
    // Predicated region
    $region37: #{deeplab_forward.5} parent=5 // pred_check
      %p332 = pneg %p331
    $region38: #{deeplab_forward.5} parent=5 // pred_check_branch
      %334 = sbr.rel (%p332) target = $region40
    $region39: #{deeplab_forward.5} parent=5 // pred_region
      %s335 = ssub.s32 %s9, 2
      // Predicated region
      $region41: #{deeplab_forward.5} parent=39 // pred_check
        %p336 = pneg %p122
      $region42: #{deeplab_forward.5} parent=39 // pred_check_branch
        %338 = sbr.rel (%p336) target = $region44
      $region43: #{deeplab_forward.5} parent=39 // pred_region
        %p339 = scmp.lt.s32.totalorder %s20, 1
        %s340 = scalar_select %p339, %s20, 1
        %p341 = scmp.lt.s32.totalorder %s21, 0
        %s342 = scalar_select %p341, %s21, 0
        %s343 = smul.addr %s340, 2
        %s344 = sadd.s32 %s342, %s343
        %s345 = smul.addr %s344, 4
        %s346 = scalar_lea.vmem %s3, %s345
      $region44: #{deeplab_forward.5} parent=39 // pred_fallthru
        _
    $region40: #{deeplab_forward.5} parent=5 // pred_fallthru
      _
  $region6: #{deeplab_forward.5} parent=0 // loop_footer
    %s13 = sadd.s32 1, %s9
  $region7: #{deeplab_forward.5} parent=0 // loop_footer_branch
    %8 = sbr.rel target = $region3
  $region8: #{deeplab_forward.5} parent=0 // loop_exit
    _

// kernel: deeplab_forward.6
$region0: #{deeplab_forward.6}
  #allocation0 [shape = 'u32[]', space=smem, size = 0x4, offset = 0x4, fixed_abs, tag = 'smem constant byte address 0x4 - core index']
  #allocation1 [shape = 'u32[144,128]{1,0:T(1,128)}', space=vmem, size = 0x12000, scoped, tag = 'internal scratch']
  %s0 = inlined_call_operand.vmem [shape: bf16[2,144,4], index: 0, kind: input, shape index: {}]
  %s1 = inlined_call_operand.vmem [shape: bf16[32,144], index: 1, kind: input, shape index: {}]
  %s2 = inlined_call_operand.vmem [shape: f32[32,1], index: 2, kind: input, shape index: {}]
  %s3 = inlined_call_operand.vmem [shape: bf16[2,32,4], index: 3, kind: output, shape index: {}]
  %s4 = sld [smem:[#allocation0]]
  $region45: #{deeplab_forward.6} parent=0
    _
  %s6 = ssub.s32 1, %s4
  %s7 = scalar_select 0, %s6, %s4
  loop: start=0, step=1, limit=4
  $region2: #{deeplab_forward.6} parent=0 // loop_pre_header
    _
  $region3: #{deeplab_forward.6} parent=0 // loop_header
    %s9 = sphi 0, %s13
    %p10 = scmp.ge.s32.totalorder %s9, 4
    %s16 = sphi 0, %s28
    %s17 = sphi 0, %s24
    %s18 = sphi 0, %s16
    %s19 = sphi 0, %s17
    %s20 = sphi 0, %s18
    %s21 = sphi 0, %s19
    %s33 = sphi 0, %s35
    %s36 = sphi 0, %s33
    %s37 = sphi 0, %s36
    %s53 = sphi 0, %s37
    %s57 = sphi 0, %s57
    %s59 = sphi 0, %s57
    %s60 = sphi 0, %s59
    %s74 = sphi 0, %s60
    %s78 = sphi 0, %s78
    %s80 = sphi 0, %s78
    %s81 = sphi 0, %s80
    %s95 = sphi 0, %s81
    %s103 = sphi 0, %s105
    %s106 = sphi 0, %s103
    %s107 = sphi 0, %s106
    %s123 = sphi 0, %s107
  $region4: #{deeplab_forward.6} parent=0 // loop_header_branch
    %12 = sbr.rel (%p10) target = $region8
  $region5: #{deeplab_forward.6} parent=0 // loop_body
    %s14 = ssub.s32 %s9, 1
    %s15 = ssub.s32 %s9, 2
    %s22 = sadd.s32 1, %s17
    %p23 = scmp.ge.s32.totalorder %s22, 1
    %s24 = scalar_select %p23, 0, %s22
    %s25 = sadd.s32 1, %s16
    %s26 = scalar_select %p23, %s25, %s16
    %p27 = scmp.ge.s32.totalorder %s26, 2
    %s28 = scalar_select %p27, 0, %s26
    %s29 = ssub.s32 %s16, %s28
    %s30 = ssub.s32 %s17, %s24
    %s31 = sor.u32 %s29, %s30
    %p32 = scmp.eq.s32.totalorder %s31, 0
    %s34 = sadd.s32 %s33, 1
    %s35 = scalar_select %p32, %s33, %s34
    %p38 = pneg %p32
    %p39 = scmp.eq.s32.totalorder %s9, 1
    %p40 = por %p38, %p39
    %p41 = scmp.ne.s32.totalorder %s33, %s36
    %p42 = scmp.eq.s32.totalorder %s9, 0
    %p43 = por %p41, %p42
    %p44 = scmp.ne.s32.totalorder %s33, %s36
    %p45 = scmp.eq.s32.totalorder %s14, 1
    %p46 = por %p44, %p45
    %p47 = scmp.ne.s32.totalorder %s36, %s37
    %p48 = scmp.eq.s32.totalorder %s14, 0
    %p49 = por %p47, %p48
    %p50 = scmp.ne.s32.totalorder %s36, %s37
    %p51 = scmp.eq.s32.totalorder %s15, 1
    %p52 = por %p50, %p51
    %p54 = scmp.ne.s32.totalorder %s37, %s53
    %p55 = scmp.eq.s32.totalorder %s15, 0
    %p56 = por %p54, %p55
    %s58 = sadd.s32 %s57, 1
    %p61 = scmp.eq.s32.totalorder %s9, 1
    %p62 = scmp.ne.s32.totalorder %s57, %s59
    %p63 = scmp.eq.s32.totalorder %s9, 0
    %p64 = por %p62, %p63
    %p65 = scmp.ne.s32.totalorder %s57, %s59
    %p66 = scmp.eq.s32.totalorder %s14, 1
    %p67 = por %p65, %p66
    %p68 = scmp.ne.s32.totalorder %s59, %s60
    %p69 = scmp.eq.s32.totalorder %s14, 0
    %p70 = por %p68, %p69
    %p71 = scmp.ne.s32.totalorder %s59, %s60
    %p72 = scmp.eq.s32.totalorder %s15, 1
    %p73 = por %p71, %p72
    %p75 = scmp.ne.s32.totalorder %s60, %s74
    %p76 = scmp.eq.s32.totalorder %s15, 0
    %p77 = por %p75, %p76
    %s79 = sadd.s32 %s78, 1
    %p82 = scmp.eq.s32.totalorder %s9, 1
    %p83 = scmp.ne.s32.totalorder %s78, %s80
    %p84 = scmp.eq.s32.totalorder %s9, 0
    %p85 = por %p83, %p84
    %p86 = scmp.ne.s32.totalorder %s78, %s80
    %p87 = scmp.eq.s32.totalorder %s14, 1
    %p88 = por %p86, %p87
    %p89 = scmp.ne.s32.totalorder %s80, %s81
    %p90 = scmp.eq.s32.totalorder %s14, 0
    %p91 = por %p89, %p90
    %p92 = scmp.ne.s32.totalorder %s80, %s81
    %p93 = scmp.eq.s32.totalorder %s15, 1
    %p94 = por %p92, %p93
    %p96 = scmp.ne.s32.totalorder %s81, %s95
    %p97 = scmp.eq.s32.totalorder %s15, 0
    %p98 = por %p96, %p97
    %s99 = ssub.s32 %s16, %s28
    %s100 = ssub.s32 %s17, %s24
    %s101 = sor.u32 %s99, %s100
    %p102 = scmp.eq.s32.totalorder %s101, 0
    %s104 = sadd.s32 %s103, 1
    %s105 = scalar_select %p102, %s103, %s104
    %p108 = pneg %p102
    %p109 = scmp.eq.s32.totalorder %s9, 1
    %p110 = por %p108, %p109
    %p111 = scmp.ne.s32.totalorder %s103, %s106
    %p112 = scmp.eq.s32.totalorder %s9, 0
    %p113 = por %p111, %p112
    %p114 = scmp.ne.s32.totalorder %s103, %s106
    %p115 = scmp.eq.s32.totalorder %s14, 1
    %p116 = por %p114, %p115
    %p117 = scmp.ne.s32.totalorder %s106, %s107
    %p118 = scmp.eq.s32.totalorder %s14, 0
    %p119 = por %p117, %p118
    %p120 = scmp.ne.s32.totalorder %s106, %s107
    %p121 = scmp.eq.s32.totalorder %s15, 1
    %p122 = por %p120, %p121
    %p124 = scmp.ne.s32.totalorder %s107, %s123
    %p125 = scmp.eq.s32.totalorder %s15, 0
    %p126 = por %p124, %p125
    %p127 = scmp.le.s32.totalorder 1, %s9
    %p128 = scmp.lt.s32.totalorder %s9, 3
    %p129 = pnand %p127, %p128
    %p130 = pneg %p129
    // Predicated region
    $region9: #{deeplab_forward.6} parent=5 // pred_check
      _
    $region10: #{deeplab_forward.6} parent=5 // pred_check_branch
      %132 = sbr.rel (%p129) target = $region12
    $region11: #{deeplab_forward.6} parent=5 // pred_region
      %s133 = ssub.s32 %s9, 1
      // Predicated region
      $region13: #{deeplab_forward.6} parent=11 // pred_check
        %p134 = pneg %p70
      $region14: #{deeplab_forward.6} parent=11 // pred_check_branch
        %136 = sbr.rel (%p134) target = $region16
      $region15: #{deeplab_forward.6} parent=11 // pred_region
        _
      $region16: #{deeplab_forward.6} parent=11 // pred_fallthru
        _
      // Predicated region
      $region17: #{deeplab_forward.6} parent=11 // pred_check
        %p137 = pneg %p91
      $region18: #{deeplab_forward.6} parent=11 // pred_check_branch
        %139 = sbr.rel (%p137) target = $region20
      $region19: #{deeplab_forward.6} parent=11 // pred_region
        _
      $region20: #{deeplab_forward.6} parent=11 // pred_fallthru
        _
    $region12: #{deeplab_forward.6} parent=5 // pred_fallthru
      _
    %p140 = scmp.lt.s32.totalorder %s9, 2
    // Predicated region
    $region21: #{deeplab_forward.6} parent=5 // pred_check
      %p141 = pneg %p140
    $region22: #{deeplab_forward.6} parent=5 // pred_check_branch
      %143 = sbr.rel (%p141) target = $region24
    $region23: #{deeplab_forward.6} parent=5 // pred_region
      // Predicated region
      $region25: #{deeplab_forward.6} parent=23 // pred_check
        %p144 = pneg %p43
      $region26: #{deeplab_forward.6} parent=23 // pred_check_branch
        %146 = sbr.rel (%p144) target = $region28
      $region27: #{deeplab_forward.6} parent=23 // pred_region
        %p147 = scmp.lt.s32.totalorder %s16, 1
        %s148 = scalar_select %p147, %s16, 1
        %p149 = scmp.lt.s32.totalorder %s17, 0
        %s150 = scalar_select %p149, %s17, 0
        %s151 = smul.addr %s148, 18
        %s152 = sadd.s32 %s150, %s151
        %s153 = smul.addr %s152, 4
        %s154 = scalar_lea.vmem %s0, %s153
      $region28: #{deeplab_forward.6} parent=23 // pred_fallthru
        _
    $region24: #{deeplab_forward.6} parent=5 // pred_fallthru
      _
    %p155 = scmp.le.s32.totalorder 1, %s9
    %p156 = scmp.lt.s32.totalorder %s9, 3
    %p157 = pnand %p155, %p156
    %p158 = pneg %p157
    // Predicated region
    $region29: #{deeplab_forward.6} parent=5 // pred_check
      _
    $region30: #{deeplab_forward.6} parent=5 // pred_check_branch
      %160 = sbr.rel (%p157) target = $region32
    $region31: #{deeplab_forward.6} parent=5 // pred_region
      %s161 = ssub.s32 %s9, 1
      %p162 = scmp.lt.s32.totalorder %s18, 1
      %s163 = scalar_select %p162, %s18, 1
      %p164 = scmp.lt.s32.totalorder %s19, 0
      %s165 = scalar_select %p164, %s19, 0
      %s166 = smul.addr %s163, 18
      %s167 = sadd.s32 %s165, %s166
      %s168 = smul.addr %s167, 4
      %s169 = scalar_lea.vmem %s0, %s168
      %p170 = pneg %p49
      %p171 = pneg %p46
      %p172 = pneg %p70
      %p173 = pneg %p67
      %p174 = pneg %p91
      %p175 = pneg %p88
      %p176 = pneg %p119
      %p177 = pneg %p116
      %p178 = scmp.lt.s32.totalorder %s18, 1
      %s179 = scalar_select %p178, %s18, 1
      %p180 = scmp.lt.s32.totalorder %s19, 0
      %s181 = scalar_select %p180, %s19, 0
      %s182 = smul.addr %s179, 4
      %s183 = sadd.s32 %s181, %s182
      %s184 = smul.addr %s183, 4
      %s185 = scalar_lea.vmem %s3, %s184
      %p186 = scmp.lt.s32.totalorder %s18, 1
      %s187 = scalar_select %p186, %s18, 1
      %p188 = scmp.lt.s32.totalorder %s19, 0
      %s189 = scalar_select %p188, %s19, 0
      %s190 = smul.addr %s187, 18
      %s191 = sadd.s32 %s189, %s190
      %s192 = smul.addr %s191, 4
      %s193 = scalar_lea.vmem %s0, %s192
      %p194 = scmp.lt.s32.totalorder %s18, 1
      %s195 = scalar_select %p194, %s18, 1
      %p196 = scmp.lt.s32.totalorder %s19, 0
      %s197 = scalar_select %p196, %s19, 0
      %s198 = smul.addr %s195, 4
      %s199 = sadd.s32 %s197, %s198
      %s200 = smul.addr %s199, 4
      %s201 = scalar_lea.vmem %s3, %s200
      %v203 = vld [vmem:[%s1] sm:$0xff]
      %v204 = vld [vmem:[%s1 + $0x8] sm:$0xff]
      %v205 = vld [vmem:[%s1 + $0x10] sm:$0xff]
      %v206 = vld [vmem:[%s1 + $0x18] sm:$0xff]
      %v207 = vld [vmem:[%s193] sm:$0xf]
      %v208 = vld [vmem:[%s193 + $0x4] sm:$0xf]
      %v209 = vld [vmem:[%s193 + $0x8] sm:$0xf]
      %v210 = vld [vmem:[%s193 + $0xc] sm:$0xf]
      %v211 = vld [vmem:[%s193 + $0x10] sm:$0xf]
      %v212 = vld [vmem:[%s193 + $0x14] sm:$0xf]
      %v213 = vld [vmem:[%s193 + $0x18] sm:$0xf]
      %v214 = vld [vmem:[%s193 + $0x1c] sm:$0xf]
      %v215 = vld [vmem:[%s193 + $0x20] sm:$0xf]
      %v216 = vld [vmem:[%s193 + $0x24] sm:$0xf]
      %v217 = vld [vmem:[%s193 + $0x28] sm:$0xf]
      %v218 = vld [vmem:[%s193 + $0x2c] sm:$0xf]
      %v219 = vld [vmem:[%s193 + $0x30] sm:$0xf]
      %v220 = vld [vmem:[%s193 + $0x34] sm:$0xf]
      %v221 = vld [vmem:[%s193 + $0x38] sm:$0xf]
      %v222 = vld [vmem:[%s193 + $0x3c] sm:$0xf]
      %v223 = vld [vmem:[%s193 + $0x40] sm:$0xf]
      %v224 = vld [vmem:[%s193 + $0x44] sm:$0xf]
      %v225 = vld [vmem:[%s2] sm:$0xff]
      %v226 = vld [vmem:[%s2 + $0x8] sm:$0xff]
      %v227 = vld [vmem:[%s2 + $0x10] sm:$0xff]
      %v228 = vld [vmem:[%s2 + $0x18] sm:$0xff]
      %230 = vset.pattern.permute.xlu0 0
      %231 = vperm.xlu0 %230, %v225
      %v232 = vpop.permute.xlu0 %231
      %235 = vset.pattern.permute.xlu0 0
      %236 = vperm.xlu0 %235, %v226
      %v237 = vpop.permute.xlu0 %236
      %240 = vset.pattern.permute.xlu0 0
      %241 = vperm.xlu0 %240, %v227
      %v242 = vpop.permute.xlu0 %241
      %245 = vset.pattern.permute.xlu0 0
      %246 = vperm.xlu0 %245, %v228
      %v247 = vpop.permute.xlu0 %246
      %v253 = vunpack.c.l.b16 %v203
      %v254 = vunpack.c.h.b16 %v203
      %v255 = vunpack.c.l.b16 %v204
      %v256 = vunpack.c.h.b16 %v204
      %v257 = vunpack.c.l.b16 %v205
      %v258 = vunpack.c.h.b16 %v205
      %v259 = vunpack.c.l.b16 %v206
      %v260 = vunpack.c.h.b16 %v206
      %v261 = vpack.c.b16 %v255, %v253
      %v262 = vpack.c.b16 %v256, %v254
      %v263 = vpack.c.b16 %v259, %v257
      %v264 = vpack.c.b16 %v260, %v258
      %v285 = vunpack.c.l.b16 %v207
      %v286 = vunpack.c.l.b16 %v208
      %v287 = vunpack.c.l.b16 %v209
      %v288 = vunpack.c.l.b16 %v210
      %v289 = vunpack.c.l.b16 %v211
      %v290 = vunpack.c.l.b16 %v212
      %v291 = vunpack.c.l.b16 %v213
      %v292 = vunpack.c.l.b16 %v214
      %v293 = vunpack.c.l.b16 %v215
      %v294 = vunpack.c.l.b16 %v216
      %v295 = vunpack.c.l.b16 %v217
      %v296 = vunpack.c.l.b16 %v218
      %v297 = vunpack.c.l.b16 %v219
      %v298 = vunpack.c.l.b16 %v220
      %v299 = vunpack.c.l.b16 %v221
      %v300 = vunpack.c.l.b16 %v222
      %v301 = vunpack.c.l.b16 %v223
      %v302 = vunpack.c.l.b16 %v224
      %v303 = vpack.c.b16 %v286, %v285
      %v304 = vpack.c.b16 %v288, %v287
      %v305 = vpack.c.b16 %v290, %v289
      %v306 = vpack.c.b16 %v292, %v291
      %v307 = vpack.c.b16 %v294, %v293
      %v308 = vpack.c.b16 %v296, %v295
      %v309 = vpack.c.b16 %v298, %v297
      %v310 = vpack.c.b16 %v300, %v299
      %v311 = vpack.c.b16 %v302, %v301
      %vm321 = vcmask 130048
      %v323 = vsel %vm321, %v262, 0
      %v326 = vsel %vm321, %v264, 0
      %328 = vmatprep.subr.bf16.mxu0 0
      %329 = vmatpush1.bf16.msra.mxu0 %v310
      %330 = vmatprep.subr.bf16.mxu0 0
      %331 = vmatpush1.bf16.msra.mxu0 %v309
      %332 = vmatprep.subr.bf16.mxu0 0
      %333 = vmatpush1.bf16.msra.mxu0 %v308
      %334 = vmatprep.subr.bf16.mxu0 0
      %335 = vmatpush1.bf16.msra.mxu0 %v307
      %336 = vmatprep.subr.bf16.mxu0 0
      %337 = vmatpush1.bf16.msra.mxu0 %v306
      %338 = vmatprep.subr.bf16.mxu0 0
      %339 = vmatpush1.bf16.msra.mxu0 %v305
      %340 = vmatprep.subr.bf16.mxu0 0
      %341 = vmatpush1.bf16.msra.mxu0 %v304
      %342 = vmatprep.subr.bf16.mxu0 0
      %343 = vmatpush1.bf16.msra.mxu0 %v303
      %344 = vmatprep.subr.bf16.mxu0 0
      %345 = vmatpush2.bf16.msra.mxu0 0
      %346 = vmatprep.subr.bf16.mxu0 0
      %347 = vmatpush2.bf16.msra.mxu0 0
      %348 = vmatprep.subr.bf16.mxu0 0
      %349 = vmatpush2.bf16.msra.mxu0 0
      %350 = vmatprep.subr.bf16.mxu0 0
      %351 = vmatpush2.bf16.msra.mxu0 0
      %352 = vmatprep.subr.bf16.mxu0 0
      %353 = vmatpush2.bf16.msra.mxu0 0
      %354 = vmatprep.subr.bf16.mxu0 0
      %355 = vmatpush2.bf16.msra.mxu0 0
      %356 = vmatprep.subr.bf16.mxu0 0
      %357 = vmatpush2.bf16.msra.mxu0 0
      %358 = vmatprep.subr.bf16.mxu0 0
      %359 = vmatpush2.bf16.msra.mxu0 %v311
      %360 = vmatprep.mubr.bf16.mxu0 %v323
      %361 = vmatmul.mubr.bf16.gmra.mxu0 %v261
      %v362 = vpop.f32.mrf.mxu0
      %v363 = vadd.f32 %v232, %v362
      %v364 = vpop.f32.mrf.mxu0
      %v365 = vpop.f32.mrf.mxu0
      %v366 = vadd.f32 %v237, %v365
      %v367 = vpop.f32.mrf.mxu0
      %368 = vmatprep.mubr.bf16.mxu0 %v326
      %369 = vmatmul.mubr.bf16.gmra.mxu0 %v263
      %v370 = vpop.f32.mrf.mxu0
      %v371 = vadd.f32 %v242, %v370
      %v372 = vpop.f32.mrf.mxu0
      %v373 = vpop.f32.mrf.mxu0
      %v374 = vadd.f32 %v247, %v373
      %v375 = vpop.f32.mrf.mxu0
      %376 = vdwg.mxu0
      %v377 = vmax.f32 %v363, 0.0
      %v378 = vmax.f32 %v366, 0.0
      %v379 = vmax.f32 %v371, 0.0
      %v380 = vmax.f32 %v374, 0.0
      %v381 = vpack.c.bf16 %v378, %v377
      %v382 = vpack.c.bf16 %v380, %v379
      %v385 = vunpack.c.l.b16 %v381
      %v386 = vunpack.c.h.b16 %v381
      %v387 = vunpack.c.l.b16 %v382
      %v388 = vunpack.c.h.b16 %v382
      %v389 = vpack.c.b16 %v385, %v385
      %v390 = vpack.c.b16 %v386, %v386
      %v391 = vpack.c.b16 %v387, %v387
      %v392 = vpack.c.b16 %v388, %v388
      %vm397 = vcmask 27648
      %398 = vst.msk [vmem:[%s201] sm:$0xf] %vm397, %v389
      %399 = vst.msk [vmem:[%s201 + $0x4] sm:$0xf] %vm397, %v390
      %400 = vst.msk [vmem:[%s201 + $0x8] sm:$0xf] %vm397, %v391
      %401 = vst.msk [vmem:[%s201 + $0xc] sm:$0xf] %vm397, %v392
      %p402 = scmp.lt.s32.totalorder %s18, 1
      %s403 = scalar_select %p402, %s18, 1
      %p404 = scmp.lt.s32.totalorder %s19, 0
      %s405 = scalar_select %p404, %s19, 0
      %s406 = smul.addr %s403, 4
      %s407 = sadd.s32 %s405, %s406
      %s408 = smul.addr %s407, 4
      %s409 = scalar_lea.vmem %s3, %s408
      // Predicated region
      $region33: #{deeplab_forward.6} parent=31 // pred_check
        %p410 = pneg %p116
      $region34: #{deeplab_forward.6} parent=31 // pred_check_branch
        %412 = sbr.rel (%p410) target = $region36
      $region35: #{deeplab_forward.6} parent=31 // pred_region
        _
      $region36: #{deeplab_forward.6} parent=31 // pred_fallthru
        _
    $region32: #{deeplab_forward.6} parent=5 // pred_fallthru
      _
    %p413 = scmp.le.s32.totalorder 2, %s9
    // Predicated region
    $region37: #{deeplab_forward.6} parent=5 // pred_check
      %p414 = pneg %p413
    $region38: #{deeplab_forward.6} parent=5 // pred_check_branch
      %416 = sbr.rel (%p414) target = $region40
    $region39: #{deeplab_forward.6} parent=5 // pred_region
      %s417 = ssub.s32 %s9, 2
      // Predicated region
      $region41: #{deeplab_forward.6} parent=39 // pred_check
        %p418 = pneg %p122
      $region42: #{deeplab_forward.6} parent=39 // pred_check_branch
        %420 = sbr.rel (%p418) target = $region44
      $region43: #{deeplab_forward.6} parent=39 // pred_region
        %p421 = scmp.lt.s32.totalorder %s20, 1
        %s422 = scalar_select %p421, %s20, 1
        %p423 = scmp.lt.s32.totalorder %s21, 0
        %s424 = scalar_select %p423, %s21, 0
        %s425 = smul.addr %s422, 4
        %s426 = sadd.s32 %s424, %s425
        %s427 = smul.addr %s426, 4
        %s428 = scalar_lea.vmem %s3, %s427
      $region44: #{deeplab_forward.6} parent=39 // pred_fallthru
        _
    $region40: #{deeplab_forward.6} parent=5 // pred_fallthru
      _
  $region6: #{deeplab_forward.6} parent=0 // loop_footer
    %s13 = sadd.s32 1, %s9
  $region7: #{deeplab_forward.6} parent=0 // loop_footer_branch
    %8 = sbr.rel target = $region3
  $region8: #{deeplab_forward.6} parent=0 // loop_exit
    _

// kernel: deeplab_forward.7
$region0: #{deeplab_forward.7}
  #allocation0 [shape = 'u32[]', space=smem, size = 0x4, offset = 0x4, fixed_abs, tag = 'smem constant byte address 0x4 - core index']
  #allocation1 [shape = 'u32[144,128]{1,0:T(1,128)}', space=vmem, size = 0x12000, scoped, tag = 'internal scratch']
  %s0 = inlined_call_operand.vmem [shape: bf16[2,32,4], index: 0, kind: input, shape index: {}, may-alias: {0,1,2,3}]
  %s1 = inlined_call_operand.vmem [shape: bf16[2,32,4], index: 1, kind: input, shape index: {}, may-alias: {0,1,2,3}]
  %s2 = inlined_call_operand.vmem [shape: bf16[2,32,4], index: 2, kind: input, shape index: {}, may-alias: {0,1,2,3}]
  %s3 = inlined_call_operand.vmem [shape: bf16[2,32,4], index: 3, kind: input, shape index: {}, may-alias: {0,1,2,3}]
  %s4 = inlined_call_operand.vmem [shape: bf16[16,32], index: 4, kind: input, shape index: {}]
  %s5 = inlined_call_operand.vmem [shape: bf16[16,32], index: 5, kind: input, shape index: {}]
  %s6 = inlined_call_operand.vmem [shape: bf16[16,32], index: 6, kind: input, shape index: {}]
  %s7 = inlined_call_operand.vmem [shape: bf16[16,32], index: 7, kind: input, shape index: {}]
  %s8 = inlined_call_operand.vmem [shape: f32[64,1], index: 8, kind: input, shape index: {}]
  %s9 = inlined_call_operand.vmem [shape: bf16[16,64], index: 9, kind: input, shape index: {}]
  %s10 = inlined_call_operand.vmem [shape: f32[2,16,1], index: 10, kind: input, shape index: {}]
  %s11 = inlined_call_operand.vmem [shape: bf16[2,16,4], index: 11, kind: output, shape index: {}]
  %s12 = sld [smem:[#allocation0]]
  $region77: #{deeplab_forward.7} parent=0
    _
  %s14 = ssub.s32 1, %s12
  %s15 = scalar_select 0, %s14, %s12
  loop: start=0, step=1, limit=4
  $region2: #{deeplab_forward.7} parent=0 // loop_pre_header
    _
  $region3: #{deeplab_forward.7} parent=0 // loop_header
    %s17 = sphi 0, %s21
    %p18 = scmp.ge.s32.totalorder %s17, 4
    %s24 = sphi 0, %s36
    %s25 = sphi 0, %s32
    %s26 = sphi 0, %s24
    %s27 = sphi 0, %s25
    %s28 = sphi 0, %s26
    %s29 = sphi 0, %s27
    %s41 = sphi 0, %s43
    %s44 = sphi 0, %s41
    %s45 = sphi 0, %s44
    %s61 = sphi 0, %s45
    %s69 = sphi 0, %s71
    %s72 = sphi 0, %s69
    %s73 = sphi 0, %s72
    %s89 = sphi 0, %s73
    %s97 = sphi 0, %s99
    %s100 = sphi 0, %s97
    %s101 = sphi 0, %s100
    %s117 = sphi 0, %s101
    %s125 = sphi 0, %s127
    %s128 = sphi 0, %s125
    %s129 = sphi 0, %s128
    %s145 = sphi 0, %s129
    %s149 = sphi 0, %s149
    %s151 = sphi 0, %s149
    %s152 = sphi 0, %s151
    %s166 = sphi 0, %s152
    %s170 = sphi 0, %s170
    %s172 = sphi 0, %s170
    %s173 = sphi 0, %s172
    %s187 = sphi 0, %s173
    %s191 = sphi 0, %s191
    %s193 = sphi 0, %s191
    %s194 = sphi 0, %s193
    %s208 = sphi 0, %s194
    %s212 = sphi 0, %s212
    %s214 = sphi 0, %s212
    %s215 = sphi 0, %s214
    %s229 = sphi 0, %s215
    %s233 = sphi 0, %s233
    %s235 = sphi 0, %s233
    %s236 = sphi 0, %s235
    %s250 = sphi 0, %s236
    %s254 = sphi 0, %s254
    %s256 = sphi 0, %s254
    %s257 = sphi 0, %s256
    %s271 = sphi 0, %s257
    %s277 = sphi 0, %s279
    %s280 = sphi 0, %s277
    %s281 = sphi 0, %s280
    %s297 = sphi 0, %s281
    %s305 = sphi 0, %s307
    %s308 = sphi 0, %s305
    %s309 = sphi 0, %s308
    %s325 = sphi 0, %s309
  $region4: #{deeplab_forward.7} parent=0 // loop_header_branch
    %20 = sbr.rel (%p18) target = $region8
  $region5: #{deeplab_forward.7} parent=0 // loop_body
    %s22 = ssub.s32 %s17, 1
    %s23 = ssub.s32 %s17, 2
    %s30 = sadd.s32 1, %s25
    %p31 = scmp.ge.s32.totalorder %s30, 1
    %s32 = scalar_select %p31, 0, %s30
    %s33 = sadd.s32 1, %s24
    %s34 = scalar_select %p31, %s33, %s24
    %p35 = scmp.ge.s32.totalorder %s34, 2
    %s36 = scalar_select %p35, 0, %s34
    %s37 = ssub.s32 %s24, %s36
    %s38 = ssub.s32 %s25, %s32
    %s39 = sor.u32 %s37, %s38
    %p40 = scmp.eq.s32.totalorder %s39, 0
    %s42 = sadd.s32 %s41, 1
    %s43 = scalar_select %p40, %s41, %s42
    %p46 = pneg %p40
    %p47 = scmp.eq.s32.totalorder %s17, 1
    %p48 = por %p46, %p47
    %p49 = scmp.ne.s32.totalorder %s41, %s44
    %p50 = scmp.eq.s32.totalorder %s17, 0
    %p51 = por %p49, %p50
    %p52 = scmp.ne.s32.totalorder %s41, %s44
    %p53 = scmp.eq.s32.totalorder %s22, 1
    %p54 = por %p52, %p53
    %p55 = scmp.ne.s32.totalorder %s44, %s45
    %p56 = scmp.eq.s32.totalorder %s22, 0
    %p57 = por %p55, %p56
    %p58 = scmp.ne.s32.totalorder %s44, %s45
    %p59 = scmp.eq.s32.totalorder %s23, 1
    %p60 = por %p58, %p59
    %p62 = scmp.ne.s32.totalorder %s45, %s61
    %p63 = scmp.eq.s32.totalorder %s23, 0
    %p64 = por %p62, %p63
    %s65 = ssub.s32 %s24, %s36
    %s66 = ssub.s32 %s25, %s32
    %s67 = sor.u32 %s65, %s66
    %p68 = scmp.eq.s32.totalorder %s67, 0
    %s70 = sadd.s32 %s69, 1
    %s71 = scalar_select %p68, %s69, %s70
    %p74 = pneg %p68
    %p75 = scmp.eq.s32.totalorder %s17, 1
    %p76 = por %p74, %p75
    %p77 = scmp.ne.s32.totalorder %s69, %s72
    %p78 = scmp.eq.s32.totalorder %s17, 0
    %p79 = por %p77, %p78
    %p80 = scmp.ne.s32.totalorder %s69, %s72
    %p81 = scmp.eq.s32.totalorder %s22, 1
    %p82 = por %p80, %p81
    %p83 = scmp.ne.s32.totalorder %s72, %s73
    %p84 = scmp.eq.s32.totalorder %s22, 0
    %p85 = por %p83, %p84
    %p86 = scmp.ne.s32.totalorder %s72, %s73
    %p87 = scmp.eq.s32.totalorder %s23, 1
    %p88 = por %p86, %p87
    %p90 = scmp.ne.s32.totalorder %s73, %s89
    %p91 = scmp.eq.s32.totalorder %s23, 0
    %p92 = por %p90, %p91
    %s93 = ssub.s32 %s24, %s36
    %s94 = ssub.s32 %s25, %s32
    %s95 = sor.u32 %s93, %s94
    %p96 = scmp.eq.s32.totalorder %s95, 0
    %s98 = sadd.s32 %s97, 1
    %s99 = scalar_select %p96, %s97, %s98
    %p102 = pneg %p96
    %p103 = scmp.eq.s32.totalorder %s17, 1
    %p104 = por %p102, %p103
    %p105 = scmp.ne.s32.totalorder %s97, %s100
    %p106 = scmp.eq.s32.totalorder %s17, 0
    %p107 = por %p105, %p106
    %p108 = scmp.ne.s32.totalorder %s97, %s100
    %p109 = scmp.eq.s32.totalorder %s22, 1
    %p110 = por %p108, %p109
    %p111 = scmp.ne.s32.totalorder %s100, %s101
    %p112 = scmp.eq.s32.totalorder %s22, 0
    %p113 = por %p111, %p112
    %p114 = scmp.ne.s32.totalorder %s100, %s101
    %p115 = scmp.eq.s32.totalorder %s23, 1
    %p116 = por %p114, %p115
    %p118 = scmp.ne.s32.totalorder %s101, %s117
    %p119 = scmp.eq.s32.totalorder %s23, 0
    %p120 = por %p118, %p119
    %s121 = ssub.s32 %s24, %s36
    %s122 = ssub.s32 %s25, %s32
    %s123 = sor.u32 %s121, %s122
    %p124 = scmp.eq.s32.totalorder %s123, 0
    %s126 = sadd.s32 %s125, 1
    %s127 = scalar_select %p124, %s125, %s126
    %p130 = pneg %p124
    %p131 = scmp.eq.s32.totalorder %s17, 1
    %p132 = por %p130, %p131
    %p133 = scmp.ne.s32.totalorder %s125, %s128
    %p134 = scmp.eq.s32.totalorder %s17, 0
    %p135 = por %p133, %p134
    %p136 = scmp.ne.s32.totalorder %s125, %s128
    %p137 = scmp.eq.s32.totalorder %s22, 1
    %p138 = por %p136, %p137
    %p139 = scmp.ne.s32.totalorder %s128, %s129
    %p140 = scmp.eq.s32.totalorder %s22, 0
    %p141 = por %p139, %p140
    %p142 = scmp.ne.s32.totalorder %s128, %s129
    %p143 = scmp.eq.s32.totalorder %s23, 1
    %p144 = por %p142, %p143
    %p146 = scmp.ne.s32.totalorder %s129, %s145
    %p147 = scmp.eq.s32.totalorder %s23, 0
    %p148 = por %p146, %p147
    %s150 = sadd.s32 %s149, 1
    %p153 = scmp.eq.s32.totalorder %s17, 1
    %p154 = scmp.ne.s32.totalorder %s149, %s151
    %p155 = scmp.eq.s32.totalorder %s17, 0
    %p156 = por %p154, %p155
    %p157 = scmp.ne.s32.totalorder %s149, %s151
    %p158 = scmp.eq.s32.totalorder %s22, 1
    %p159 = por %p157, %p158
    %p160 = scmp.ne.s32.totalorder %s151, %s152
    %p161 = scmp.eq.s32.totalorder %s22, 0
    %p162 = por %p160, %p161
    %p163 = scmp.ne.s32.totalorder %s151, %s152
    %p164 = scmp.eq.s32.totalorder %s23, 1
    %p165 = por %p163, %p164
    %p167 = scmp.ne.s32.totalorder %s152, %s166
    %p168 = scmp.eq.s32.totalorder %s23, 0
    %p169 = por %p167, %p168
    %s171 = sadd.s32 %s170, 1
    %p174 = scmp.eq.s32.totalorder %s17, 1
    %p175 = scmp.ne.s32.totalorder %s170, %s172
    %p176 = scmp.eq.s32.totalorder %s17, 0
    %p177 = por %p175, %p176
    %p178 = scmp.ne.s32.totalorder %s170, %s172
    %p179 = scmp.eq.s32.totalorder %s22, 1
    %p180 = por %p178, %p179
    %p181 = scmp.ne.s32.totalorder %s172, %s173
    %p182 = scmp.eq.s32.totalorder %s22, 0
    %p183 = por %p181, %p182
    %p184 = scmp.ne.s32.totalorder %s172, %s173
    %p185 = scmp.eq.s32.totalorder %s23, 1
    %p186 = por %p184, %p185
    %p188 = scmp.ne.s32.totalorder %s173, %s187
    %p189 = scmp.eq.s32.totalorder %s23, 0
    %p190 = por %p188, %p189
    %s192 = sadd.s32 %s191, 1
    %p195 = scmp.eq.s32.totalorder %s17, 1
    %p196 = scmp.ne.s32.totalorder %s191, %s193
    %p197 = scmp.eq.s32.totalorder %s17, 0
    %p198 = por %p196, %p197
    %p199 = scmp.ne.s32.totalorder %s191, %s193
    %p200 = scmp.eq.s32.totalorder %s22, 1
    %p201 = por %p199, %p200
    %p202 = scmp.ne.s32.totalorder %s193, %s194
    %p203 = scmp.eq.s32.totalorder %s22, 0
    %p204 = por %p202, %p203
    %p205 = scmp.ne.s32.totalorder %s193, %s194
    %p206 = scmp.eq.s32.totalorder %s23, 1
    %p207 = por %p205, %p206
    %p209 = scmp.ne.s32.totalorder %s194, %s208
    %p210 = scmp.eq.s32.totalorder %s23, 0
    %p211 = por %p209, %p210
    %s213 = sadd.s32 %s212, 1
    %p216 = scmp.eq.s32.totalorder %s17, 1
    %p217 = scmp.ne.s32.totalorder %s212, %s214
    %p218 = scmp.eq.s32.totalorder %s17, 0
    %p219 = por %p217, %p218
    %p220 = scmp.ne.s32.totalorder %s212, %s214
    %p221 = scmp.eq.s32.totalorder %s22, 1
    %p222 = por %p220, %p221
    %p223 = scmp.ne.s32.totalorder %s214, %s215
    %p224 = scmp.eq.s32.totalorder %s22, 0
    %p225 = por %p223, %p224
    %p226 = scmp.ne.s32.totalorder %s214, %s215
    %p227 = scmp.eq.s32.totalorder %s23, 1
    %p228 = por %p226, %p227
    %p230 = scmp.ne.s32.totalorder %s215, %s229
    %p231 = scmp.eq.s32.totalorder %s23, 0
    %p232 = por %p230, %p231
    %s234 = sadd.s32 %s233, 1
    %p237 = scmp.eq.s32.totalorder %s17, 1
    %p238 = scmp.ne.s32.totalorder %s233, %s235
    %p239 = scmp.eq.s32.totalorder %s17, 0
    %p240 = por %p238, %p239
    %p241 = scmp.ne.s32.totalorder %s233, %s235
    %p242 = scmp.eq.s32.totalorder %s22, 1
    %p243 = por %p241, %p242
    %p244 = scmp.ne.s32.totalorder %s235, %s236
    %p245 = scmp.eq.s32.totalorder %s22, 0
    %p246 = por %p244, %p245
    %p247 = scmp.ne.s32.totalorder %s235, %s236
    %p248 = scmp.eq.s32.totalorder %s23, 1
    %p249 = por %p247, %p248
    %p251 = scmp.ne.s32.totalorder %s236, %s250
    %p252 = scmp.eq.s32.totalorder %s23, 0
    %p253 = por %p251, %p252
    %s255 = sadd.s32 %s254, 1
    %p258 = scmp.eq.s32.totalorder %s17, 1
    %p259 = scmp.ne.s32.totalorder %s254, %s256
    %p260 = scmp.eq.s32.totalorder %s17, 0
    %p261 = por %p259, %p260
    %p262 = scmp.ne.s32.totalorder %s254, %s256
    %p263 = scmp.eq.s32.totalorder %s22, 1
    %p264 = por %p262, %p263
    %p265 = scmp.ne.s32.totalorder %s256, %s257
    %p266 = scmp.eq.s32.totalorder %s22, 0
    %p267 = por %p265, %p266
    %p268 = scmp.ne.s32.totalorder %s256, %s257
    %p269 = scmp.eq.s32.totalorder %s23, 1
    %p270 = por %p268, %p269
    %p272 = scmp.ne.s32.totalorder %s257, %s271
    %p273 = scmp.eq.s32.totalorder %s23, 0
    %p274 = por %p272, %p273
    %s275 = ssub.s32 %s24, %s36
    %p276 = scmp.eq.s32.totalorder %s275, 0
    %s278 = sadd.s32 %s277, 1
    %s279 = scalar_select %p276, %s277, %s278
    %p282 = pneg %p276
    %p283 = scmp.eq.s32.totalorder %s17, 1
    %p284 = por %p282, %p283
    %p285 = scmp.ne.s32.totalorder %s277, %s280
    %p286 = scmp.eq.s32.totalorder %s17, 0
    %p287 = por %p285, %p286
    %p288 = scmp.ne.s32.totalorder %s277, %s280
    %p289 = scmp.eq.s32.totalorder %s22, 1
    %p290 = por %p288, %p289
    %p291 = scmp.ne.s32.totalorder %s280, %s281
    %p292 = scmp.eq.s32.totalorder %s22, 0
    %p293 = por %p291, %p292
    %p294 = scmp.ne.s32.totalorder %s280, %s281
    %p295 = scmp.eq.s32.totalorder %s23, 1
    %p296 = por %p294, %p295
    %p298 = scmp.ne.s32.totalorder %s281, %s297
    %p299 = scmp.eq.s32.totalorder %s23, 0
    %p300 = por %p298, %p299
    %s301 = ssub.s32 %s24, %s36
    %s302 = ssub.s32 %s25, %s32
    %s303 = sor.u32 %s301, %s302
    %p304 = scmp.eq.s32.totalorder %s303, 0
    %s306 = sadd.s32 %s305, 1
    %s307 = scalar_select %p304, %s305, %s306
    %p310 = pneg %p304
    %p311 = scmp.eq.s32.totalorder %s17, 1
    %p312 = por %p310, %p311
    %p313 = scmp.ne.s32.totalorder %s305, %s308
    %p314 = scmp.eq.s32.totalorder %s17, 0
    %p315 = por %p313, %p314
    %p316 = scmp.ne.s32.totalorder %s305, %s308
    %p317 = scmp.eq.s32.totalorder %s22, 1
    %p318 = por %p316, %p317
    %p319 = scmp.ne.s32.totalorder %s308, %s309
    %p320 = scmp.eq.s32.totalorder %s22, 0
    %p321 = por %p319, %p320
    %p322 = scmp.ne.s32.totalorder %s308, %s309
    %p323 = scmp.eq.s32.totalorder %s23, 1
    %p324 = por %p322, %p323
    %p326 = scmp.ne.s32.totalorder %s309, %s325
    %p327 = scmp.eq.s32.totalorder %s23, 0
    %p328 = por %p326, %p327
    %p329 = scmp.le.s32.totalorder 1, %s17
    %p330 = scmp.lt.s32.totalorder %s17, 3
    %p331 = pnand %p329, %p330
    %p332 = pneg %p331
    // Predicated region
    $region9: #{deeplab_forward.7} parent=5 // pred_check
      _
    $region10: #{deeplab_forward.7} parent=5 // pred_check_branch
      %334 = sbr.rel (%p331) target = $region12
    $region11: #{deeplab_forward.7} parent=5 // pred_region
      %s335 = ssub.s32 %s17, 1
      // Predicated region
      $region13: #{deeplab_forward.7} parent=11 // pred_check
        %p336 = pneg %p162
      $region14: #{deeplab_forward.7} parent=11 // pred_check_branch
        %338 = sbr.rel (%p336) target = $region16
      $region15: #{deeplab_forward.7} parent=11 // pred_region
        _
      $region16: #{deeplab_forward.7} parent=11 // pred_fallthru
        _
      // Predicated region
      $region17: #{deeplab_forward.7} parent=11 // pred_check
        %p339 = pneg %p183
      $region18: #{deeplab_forward.7} parent=11 // pred_check_branch
        %341 = sbr.rel (%p339) target = $region20
      $region19: #{deeplab_forward.7} parent=11 // pred_region
        _
      $region20: #{deeplab_forward.7} parent=11 // pred_fallthru
        _
      // Predicated region
      $region21: #{deeplab_forward.7} parent=11 // pred_check
        %p342 = pneg %p204
      $region22: #{deeplab_forward.7} parent=11 // pred_check_branch
        %344 = sbr.rel (%p342) target = $region24
      $region23: #{deeplab_forward.7} parent=11 // pred_region
        _
      $region24: #{deeplab_forward.7} parent=11 // pred_fallthru
        _
      // Predicated region
      $region25: #{deeplab_forward.7} parent=11 // pred_check
        %p345 = pneg %p225
      $region26: #{deeplab_forward.7} parent=11 // pred_check_branch
        %347 = sbr.rel (%p345) target = $region28
      $region27: #{deeplab_forward.7} parent=11 // pred_region
        _
      $region28: #{deeplab_forward.7} parent=11 // pred_fallthru
        _
      // Predicated region
      $region29: #{deeplab_forward.7} parent=11 // pred_check
        %p348 = pneg %p246
      $region30: #{deeplab_forward.7} parent=11 // pred_check_branch
        %350 = sbr.rel (%p348) target = $region32
      $region31: #{deeplab_forward.7} parent=11 // pred_region
        _
      $region32: #{deeplab_forward.7} parent=11 // pred_fallthru
        _
      // Predicated region
      $region33: #{deeplab_forward.7} parent=11 // pred_check
        %p351 = pneg %p267
      $region34: #{deeplab_forward.7} parent=11 // pred_check_branch
        %353 = sbr.rel (%p351) target = $region36
      $region35: #{deeplab_forward.7} parent=11 // pred_region
        _
      $region36: #{deeplab_forward.7} parent=11 // pred_fallthru
        _
    $region12: #{deeplab_forward.7} parent=5 // pred_fallthru
      _
    %p354 = scmp.lt.s32.totalorder %s17, 2
    // Predicated region
    $region37: #{deeplab_forward.7} parent=5 // pred_check
      %p355 = pneg %p354
    $region38: #{deeplab_forward.7} parent=5 // pred_check_branch
      %357 = sbr.rel (%p355) target = $region40
    $region39: #{deeplab_forward.7} parent=5 // pred_region
      // Predicated region
      $region41: #{deeplab_forward.7} parent=39 // pred_check
        %p358 = pneg %p51
      $region42: #{deeplab_forward.7} parent=39 // pred_check_branch
        %360 = sbr.rel (%p358) target = $region44
      $region43: #{deeplab_forward.7} parent=39 // pred_region
        %p361 = scmp.lt.s32.totalorder %s24, 1
        %s362 = scalar_select %p361, %s24, 1
        %p363 = scmp.lt.s32.totalorder %s25, 0
        %s364 = scalar_select %p363, %s25, 0
        %s365 = smul.addr %s362, 4
        %s366 = sadd.s32 %s364, %s365
        %s367 = smul.addr %s366, 4
        %s368 = scalar_lea.vmem %s0, %s367
      $region44: #{deeplab_forward.7} parent=39 // pred_fallthru
        _
      // Predicated region
      $region45: #{deeplab_forward.7} parent=39 // pred_check
        %p369 = pneg %p79
      $region46: #{deeplab_forward.7} parent=39 // pred_check_branch
        %371 = sbr.rel (%p369) target = $region48
      $region47: #{deeplab_forward.7} parent=39 // pred_region
        %p372 = scmp.lt.s32.totalorder %s24, 1
        %s373 = scalar_select %p372, %s24, 1
        %p374 = scmp.lt.s32.totalorder %s25, 0
        %s375 = scalar_select %p374, %s25, 0
        %s376 = smul.addr %s373, 4
        %s377 = sadd.s32 %s375, %s376
        %s378 = smul.addr %s377, 4
        %s379 = scalar_lea.vmem %s1, %s378
      $region48: #{deeplab_forward.7} parent=39 // pred_fallthru
        _
      // Predicated region
      $region49: #{deeplab_forward.7} parent=39 // pred_check
        %p380 = pneg %p107
      $region50: #{deeplab_forward.7} parent=39 // pred_check_branch
        %382 = sbr.rel (%p380) target = $region52
      $region51: #{deeplab_forward.7} parent=39 // pred_region
        %p383 = scmp.lt.s32.totalorder %s24, 1
        %s384 = scalar_select %p383, %s24, 1
        %p385 = scmp.lt.s32.totalorder %s25, 0
        %s386 = scalar_select %p385, %s25, 0
        %s387 = smul.addr %s384, 4
        %s388 = sadd.s32 %s386, %s387
        %s389 = smul.addr %s388, 4
        %s390 = scalar_lea.vmem %s2, %s389
      $region52: #{deeplab_forward.7} parent=39 // pred_fallthru
        _
      // Predicated region
      $region53: #{deeplab_forward.7} parent=39 // pred_check
        %p391 = pneg %p135
      $region54: #{deeplab_forward.7} parent=39 // pred_check_branch
        %393 = sbr.rel (%p391) target = $region56
      $region55: #{deeplab_forward.7} parent=39 // pred_region
        %p394 = scmp.lt.s32.totalorder %s24, 1
        %s395 = scalar_select %p394, %s24, 1
        %p396 = scmp.lt.s32.totalorder %s25, 0
        %s397 = scalar_select %p396, %s25, 0
        %s398 = smul.addr %s395, 4
        %s399 = sadd.s32 %s397, %s398
        %s400 = smul.addr %s399, 4
        %s401 = scalar_lea.vmem %s3, %s400
      $region56: #{deeplab_forward.7} parent=39 // pred_fallthru
        _
      // Predicated region
      $region57: #{deeplab_forward.7} parent=39 // pred_check
        %p402 = pneg %p287
      $region58: #{deeplab_forward.7} parent=39 // pred_check_branch
        %404 = sbr.rel (%p402) target = $region60
      $region59: #{deeplab_forward.7} parent=39 // pred_region
        %p405 = scmp.lt.s32.totalorder %s24, 1
        %s406 = scalar_select %p405, %s24, 1
        %s407 = smul.addr %s406, 2
        %s408 = smul.addr %s407, 8
        %s409 = scalar_lea.vmem %s10, %s408
      $region60: #{deeplab_forward.7} parent=39 // pred_fallthru
        _
    $region40: #{deeplab_forward.7} parent=5 // pred_fallthru
      _
    %p410 = scmp.le.s32.totalorder 1, %s17
    %p411 = scmp.lt.s32.totalorder %s17, 3
    %p412 = pnand %p410, %p411
    %p413 = pneg %p412
    // Predicated region
    $region61: #{deeplab_forward.7} parent=5 // pred_check
      _
    $region62: #{deeplab_forward.7} parent=5 // pred_check_branch
      %415 = sbr.rel (%p412) target = $region64
    $region63: #{deeplab_forward.7} parent=5 // pred_region
      %s416 = ssub.s32 %s17, 1
      %p417 = scmp.lt.s32.totalorder %s26, 1
      %s418 = scalar_select %p417, %s26, 1
      %p419 = scmp.lt.s32.totalorder %s27, 0
      %s420 = scalar_select %p419, %s27, 0
      %s421 = smul.addr %s418, 4
      %s422 = sadd.s32 %s420, %s421
      %s423 = smul.addr %s422, 4
      %s424 = scalar_lea.vmem %s0, %s423
      %p425 = pneg %p57
      %p426 = pneg %p54
      %p427 = scmp.lt.s32.totalorder %s26, 1
      %s428 = scalar_select %p427, %s26, 1
      %p429 = scmp.lt.s32.totalorder %s27, 0
      %s430 = scalar_select %p429, %s27, 0
      %s431 = smul.addr %s428, 4
      %s432 = sadd.s32 %s430, %s431
      %s433 = smul.addr %s432, 4
      %s434 = scalar_lea.vmem %s1, %s433
      %p435 = pneg %p85
      %p436 = pneg %p82
      %p437 = scmp.lt.s32.totalorder %s26, 1
      %s438 = scalar_select %p437, %s26, 1
      %p439 = scmp.lt.s32.totalorder %s27, 0
      %s440 = scalar_select %p439, %s27, 0
      %s441 = smul.addr %s438, 4
      %s442 = sadd.s32 %s440, %s441
      %s443 = smul.addr %s442, 4
      %s444 = scalar_lea.vmem %s2, %s443
      %p445 = pneg %p113
      %p446 = pneg %p110
      %p447 = scmp.lt.s32.totalorder %s26, 1
      %s448 = scalar_select %p447, %s26, 1
      %p449 = scmp.lt.s32.totalorder %s27, 0
      %s450 = scalar_select %p449, %s27, 0
      %s451 = smul.addr %s448, 4
      %s452 = sadd.s32 %s450, %s451
      %s453 = smul.addr %s452, 4
      %s454 = scalar_lea.vmem %s3, %s453
      %p455 = pneg %p141
      %p456 = pneg %p138
      %p457 = pneg %p162
      %p458 = pneg %p159
      %p459 = pneg %p183
      %p460 = pneg %p180
      %p461 = pneg %p204
      %p462 = pneg %p201
      %p463 = pneg %p225
      %p464 = pneg %p222
      %p465 = pneg %p246
      %p466 = pneg %p243
      %p467 = pneg %p267
      %p468 = pneg %p264
      %p469 = scmp.lt.s32.totalorder %s26, 1
      %s470 = scalar_select %p469, %s26, 1
      %s471 = smul.addr %s470, 2
      %s472 = smul.addr %s471, 8
      %s473 = scalar_lea.vmem %s10, %s472
      %p474 = pneg %p293
      %p475 = pneg %p290
      %p476 = pneg %p321
      %p477 = pneg %p318
      %p478 = scmp.lt.s32.totalorder %s26, 1
      %s479 = scalar_select %p478, %s26, 1
      %p480 = scmp.lt.s32.totalorder %s27, 0
      %s481 = scalar_select %p480, %s27, 0
      %s482 = smul.addr %s479, 2
      %s483 = sadd.s32 %s481, %s482
      %s484 = smul.addr %s483, 4
      %s485 = scalar_lea.vmem %s11, %s484
      %p486 = scmp.lt.s32.totalorder %s26, 1
      %s487 = scalar_select %p486, %s26, 1
      %p488 = scmp.lt.s32.totalorder %s27, 0
      %s489 = scalar_select %p488, %s27, 0
      %s490 = smul.addr %s487, 4
      %s491 = sadd.s32 %s489, %s490
      %s492 = smul.addr %s491, 4
      %s493 = scalar_lea.vmem %s0, %s492
      %p494 = scmp.lt.s32.totalorder %s26, 1
      %s495 = scalar_select %p494, %s26, 1
      %p496 = scmp.lt.s32.totalorder %s27, 0
      %s497 = scalar_select %p496, %s27, 0
      %s498 = smul.addr %s495, 4
      %s499 = sadd.s32 %s497, %s498
      %s500 = smul.addr %s499, 4
      %s501 = scalar_lea.vmem %s1, %s500
      %p502 = scmp.lt.s32.totalorder %s26, 1
      %s503 = scalar_select %p502, %s26, 1
      %p504 = scmp.lt.s32.totalorder %s27, 0
      %s505 = scalar_select %p504, %s27, 0
      %s506 = smul.addr %s503, 4
      %s507 = sadd.s32 %s505, %s506
      %s508 = smul.addr %s507, 4
      %s509 = scalar_lea.vmem %s2, %s508
      %p510 = scmp.lt.s32.totalorder %s26, 1
      %s511 = scalar_select %p510, %s26, 1
      %p512 = scmp.lt.s32.totalorder %s27, 0
      %s513 = scalar_select %p512, %s27, 0
      %s514 = smul.addr %s511, 4
      %s515 = sadd.s32 %s513, %s514
      %s516 = smul.addr %s515, 4
      %s517 = scalar_lea.vmem %s3, %s516
      %p518 = scmp.lt.s32.totalorder %s26, 1
      %s519 = scalar_select %p518, %s26, 1
      %s520 = smul.addr %s519, 2
      %s521 = smul.addr %s520, 8
      %s522 = scalar_lea.vmem %s10, %s521
      %p523 = scmp.lt.s32.totalorder %s26, 1
      %s524 = scalar_select %p523, %s26, 1
      %p525 = scmp.lt.s32.totalorder %s27, 0
      %s526 = scalar_select %p525, %s27, 0
      %s527 = smul.addr %s524, 2
      %s528 = sadd.s32 %s526, %s527
      %s529 = smul.addr %s528, 4
      %s530 = scalar_lea.vmem %s11, %s529
      %v532 = vld [vmem:[%s4] sm:$0xf]
      %v533 = vld [vmem:[%s4 + $0x4] sm:$0xf]
      %v534 = vld [vmem:[%s493] sm:$0xf]
      %v535 = vld [vmem:[%s493 + $0x4] sm:$0xf]
      %v536 = vld [vmem:[%s493 + $0x8] sm:$0xf]
      %v537 = vld [vmem:[%s493 + $0xc] sm:$0xf]
      %v538 = vld [vmem:[%s8] sm:$0xff]
      %v539 = vld [vmem:[%s8 + $0x8] sm:$0xff]
      %541 = vset.pattern.permute.xlu0 0
      %542 = vperm.xlu0 %541, %v538
      %v543 = vpop.permute.xlu0 %542
      %546 = vset.pattern.permute.xlu0 0
      %547 = vperm.xlu0 %546, %v539
      %v548 = vpop.permute.xlu0 %547
      %v552 = vunpack.c.l.b16 %v532
      %v553 = vunpack.c.l.b16 %v533
      %v554 = vpack.c.b16 %v553, %v552
      %v559 = vunpack.c.l.b16 %v534
      %v560 = vunpack.c.l.b16 %v535
      %v561 = vunpack.c.l.b16 %v536
      %v562 = vunpack.c.l.b16 %v537
      %v563 = vpack.c.b16 %v560, %v559
      %v564 = vpack.c.b16 %v562, %v561
      %vm567 = vcmask 261120
      %v569 = vsel %vm567, %v554, 0
      %571 = vmatprep.subr.bf16.mxu0 0
      %572 = vmatpush1.bf16.msra.mxu0 0
      %573 = vmatprep.subr.bf16.mxu0 0
      %574 = vmatpush1.bf16.msra.mxu0 0
      %575 = vmatprep.subr.bf16.mxu0 0
      %576 = vmatpush1.bf16.msra.mxu0 0
      %577 = vmatprep.subr.bf16.mxu0 0
      %578 = vmatpush1.bf16.msra.mxu0 0
      %579 = vmatprep.subr.bf16.mxu0 0
      %580 = vmatpush1.bf16.msra.mxu0 0
      %581 = vmatprep.subr.bf16.mxu0 0
      %582 = vmatpush1.bf16.msra.mxu0 0
      %583 = vmatprep.subr.bf16.mxu0 0
      %584 = vmatpush1.bf16.msra.mxu0 %v564
      %585 = vmatprep.subr.bf16.mxu0 0
      %586 = vmatpush1.bf16.msra.mxu0 %v563
      %587 = vmatprep.subr.bf16.mxu0 0
      %588 = vmatpush2.bf16.msra.mxu0 0
      %589 = vmatprep.subr.bf16.mxu0 0
      %590 = vmatpush2.bf16.msra.mxu0 0
      %591 = vmatprep.subr.bf16.mxu0 0
      %592 = vmatpush2.bf16.msra.mxu0 0
      %593 = vmatprep.subr.bf16.mxu0 0
      %594 = vmatpush2.bf16.msra.mxu0 0
      %595 = vmatprep.subr.bf16.mxu0 0
      %596 = vmatpush2.bf16.msra.mxu0 0
      %597 = vmatprep.subr.bf16.mxu0 0
      %598 = vmatpush2.bf16.msra.mxu0 0
      %599 = vmatprep.subr.bf16.mxu0 0
      %600 = vmatpush2.bf16.msra.mxu0 0
      %601 = vmatprep.subr.bf16.mxu0 0
      %602 = vmatpush2.bf16.msra.mxu0 0
      %603 = vmatprep.mubr.bf16.mxu0 0
      %604 = vmatmul.mubr.bf16.gmra.mxu0 %v569
      %v605 = vpop.f32.mrf.mxu0
      %v606 = vadd.f32 %v543, %v605
      %v607 = vpop.f32.mrf.mxu0
      %v608 = vpop.f32.mrf.mxu0
      %v609 = vadd.f32 %v548, %v608
      %v610 = vpop.f32.mrf.mxu0
      %611 = vdwg.mxu0
      %v612 = vmax.f32 %v606, 0.0
      %v613 = vmax.f32 %v609, 0.0
      %v614 = vpack.c.bf16 %v613, %v612
      %v615 = vld [vmem:[%s5] sm:$0xf]
      %v616 = vld [vmem:[%s5 + $0x4] sm:$0xf]
      %v617 = vld [vmem:[%s501] sm:$0xf]
      %v618 = vld [vmem:[%s501 + $0x4] sm:$0xf]
      %v619 = vld [vmem:[%s501 + $0x8] sm:$0xf]
      %v620 = vld [vmem:[%s501 + $0xc] sm:$0xf]
      %v621 = vld [vmem:[%s8 + $0x10] sm:$0xff]
      %v622 = vld [vmem:[%s8 + $0x18] sm:$0xff]
      %624 = vset.pattern.permute.xlu0 0
      %625 = vperm.xlu0 %624, %v621
      %v626 = vpop.permute.xlu0 %625
      %629 = vset.pattern.permute.xlu0 0
      %630 = vperm.xlu0 %629, %v622
      %v631 = vpop.permute.xlu0 %630
      %v635 = vunpack.c.l.b16 %v615
      %v636 = vunpack.c.l.b16 %v616
      %v637 = vpack.c.b16 %v636, %v635
      %v642 = vunpack.c.l.b16 %v617
      %v643 = vunpack.c.l.b16 %v618
      %v644 = vunpack.c.l.b16 %v619
      %v645 = vunpack.c.l.b16 %v620
      %v646 = vpack.c.b16 %v643, %v642
      %v647 = vpack.c.b16 %v645, %v644
      %v651 = vsel %vm567, %v637, 0
      %653 = vmatprep.subr.bf16.mxu0 0
      %654 = vmatpush1.bf16.msra.mxu0 0
      %655 = vmatprep.subr.bf16.mxu0 0
      %656 = vmatpush1.bf16.msra.mxu0 0
      %657 = vmatprep.subr.bf16.mxu0 0
      %658 = vmatpush1.bf16.msra.mxu0 0
      %659 = vmatprep.subr.bf16.mxu0 0
      %660 = vmatpush1.bf16.msra.mxu0 0
      %661 = vmatprep.subr.bf16.mxu0 0
      %662 = vmatpush1.bf16.msra.mxu0 0
      %663 = vmatprep.subr.bf16.mxu0 0
      %664 = vmatpush1.bf16.msra.mxu0 0
      %665 = vmatprep.subr.bf16.mxu0 0
      %666 = vmatpush1.bf16.msra.mxu0 %v647
      %667 = vmatprep.subr.bf16.mxu0 0
      %668 = vmatpush1.bf16.msra.mxu0 %v646
      %669 = vmatprep.subr.bf16.mxu0 0
      %670 = vmatpush2.bf16.msra.mxu0 0
      %671 = vmatprep.subr.bf16.mxu0 0
      %672 = vmatpush2.bf16.msra.mxu0 0
      %673 = vmatprep.subr.bf16.mxu0 0
      %674 = vmatpush2.bf16.msra.mxu0 0
      %675 = vmatprep.subr.bf16.mxu0 0
      %676 = vmatpush2.bf16.msra.mxu0 0
      %677 = vmatprep.subr.bf16.mxu0 0
      %678 = vmatpush2.bf16.msra.mxu0 0
      %679 = vmatprep.subr.bf16.mxu0 0
      %680 = vmatpush2.bf16.msra.mxu0 0
      %681 = vmatprep.subr.bf16.mxu0 0
      %682 = vmatpush2.bf16.msra.mxu0 0
      %683 = vmatprep.subr.bf16.mxu0 0
      %684 = vmatpush2.bf16.msra.mxu0 0
      %685 = vmatprep.mubr.bf16.mxu0 0
      %686 = vmatmul.mubr.bf16.gmra.mxu0 %v651
      %v687 = vpop.f32.mrf.mxu0
      %v688 = vadd.f32 %v626, %v687
      %v689 = vpop.f32.mrf.mxu0
      %v690 = vpop.f32.mrf.mxu0
      %v691 = vadd.f32 %v631, %v690
      %v692 = vpop.f32.mrf.mxu0
      %693 = vdwg.mxu0
      %v694 = vmax.f32 %v688, 0.0
      %v695 = vmax.f32 %v691, 0.0
      %v696 = vpack.c.bf16 %v695, %v694
      %v697 = vld [vmem:[%s6] sm:$0xf]
      %v698 = vld [vmem:[%s6 + $0x4] sm:$0xf]
      %v699 = vld [vmem:[%s509] sm:$0xf]
      %v700 = vld [vmem:[%s509 + $0x4] sm:$0xf]
      %v701 = vld [vmem:[%s509 + $0x8] sm:$0xf]
      %v702 = vld [vmem:[%s509 + $0xc] sm:$0xf]
      %v703 = vld [vmem:[%s8 + $0x20] sm:$0xff]
      %v704 = vld [vmem:[%s8 + $0x28] sm:$0xff]
      %706 = vset.pattern.permute.xlu0 0
      %707 = vperm.xlu0 %706, %v703
      %v708 = vpop.permute.xlu0 %707
      %711 = vset.pattern.permute.xlu0 0
      %712 = vperm.xlu0 %711, %v704
      %v713 = vpop.permute.xlu0 %712
      %v717 = vunpack.c.l.b16 %v697
      %v718 = vunpack.c.l.b16 %v698
      %v719 = vpack.c.b16 %v718, %v717
      %v724 = vunpack.c.l.b16 %v699
      %v725 = vunpack.c.l.b16 %v700
      %v726 = vunpack.c.l.b16 %v701
      %v727 = vunpack.c.l.b16 %v702
      %v728 = vpack.c.b16 %v725, %v724
      %v729 = vpack.c.b16 %v727, %v726
      %v733 = vsel %vm567, %v719, 0
      %735 = vmatprep.subr.bf16.mxu0 0
      %736 = vmatpush1.bf16.msra.mxu0 0
      %737 = vmatprep.subr.bf16.mxu0 0
      %738 = vmatpush1.bf16.msra.mxu0 0
      %739 = vmatprep.subr.bf16.mxu0 0
      %740 = vmatpush1.bf16.msra.mxu0 0
      %741 = vmatprep.subr.bf16.mxu0 0
      %742 = vmatpush1.bf16.msra.mxu0 0
      %743 = vmatprep.subr.bf16.mxu0 0
      %744 = vmatpush1.bf16.msra.mxu0 0
      %745 = vmatprep.subr.bf16.mxu0 0
      %746 = vmatpush1.bf16.msra.mxu0 0
      %747 = vmatprep.subr.bf16.mxu0 0
      %748 = vmatpush1.bf16.msra.mxu0 %v729
      %749 = vmatprep.subr.bf16.mxu0 0
      %750 = vmatpush1.bf16.msra.mxu0 %v728
      %751 = vmatprep.subr.bf16.mxu0 0
      %752 = vmatpush2.bf16.msra.mxu0 0
      %753 = vmatprep.subr.bf16.mxu0 0
      %754 = vmatpush2.bf16.msra.mxu0 0
      %755 = vmatprep.subr.bf16.mxu0 0
      %756 = vmatpush2.bf16.msra.mxu0 0
      %757 = vmatprep.subr.bf16.mxu0 0
      %758 = vmatpush2.bf16.msra.mxu0 0
      %759 = vmatprep.subr.bf16.mxu0 0
      %760 = vmatpush2.bf16.msra.mxu0 0
      %761 = vmatprep.subr.bf16.mxu0 0
      %762 = vmatpush2.bf16.msra.mxu0 0
      %763 = vmatprep.subr.bf16.mxu0 0
      %764 = vmatpush2.bf16.msra.mxu0 0
      %765 = vmatprep.subr.bf16.mxu0 0
      %766 = vmatpush2.bf16.msra.mxu0 0
      %767 = vmatprep.mubr.bf16.mxu0 0
      %768 = vmatmul.mubr.bf16.gmra.mxu0 %v733
      %v769 = vpop.f32.mrf.mxu0
      %v770 = vadd.f32 %v708, %v769
      %v771 = vpop.f32.mrf.mxu0
      %v772 = vpop.f32.mrf.mxu0
      %v773 = vadd.f32 %v713, %v772
      %v774 = vpop.f32.mrf.mxu0
      %775 = vdwg.mxu0
      %v776 = vmax.f32 %v770, 0.0
      %v777 = vmax.f32 %v773, 0.0
      %v778 = vpack.c.bf16 %v777, %v776
      %v779 = vld [vmem:[%s7] sm:$0xf]
      %v780 = vld [vmem:[%s7 + $0x4] sm:$0xf]
      %v781 = vld [vmem:[%s517] sm:$0xf]
      %v782 = vld [vmem:[%s517 + $0x4] sm:$0xf]
      %v783 = vld [vmem:[%s517 + $0x8] sm:$0xf]
      %v784 = vld [vmem:[%s517 + $0xc] sm:$0xf]
      %v785 = vld [vmem:[%s8 + $0x30] sm:$0xff]
      %v786 = vld [vmem:[%s8 + $0x38] sm:$0xff]
      %788 = vset.pattern.permute.xlu0 0
      %789 = vperm.xlu0 %788, %v785
      %v790 = vpop.permute.xlu0 %789
      %793 = vset.pattern.permute.xlu0 0
      %794 = vperm.xlu0 %793, %v786
      %v795 = vpop.permute.xlu0 %794
      %v799 = vunpack.c.l.b16 %v779
      %v800 = vunpack.c.l.b16 %v780
      %v801 = vpack.c.b16 %v800, %v799
      %v806 = vunpack.c.l.b16 %v781
      %v807 = vunpack.c.l.b16 %v782
      %v808 = vunpack.c.l.b16 %v783
      %v809 = vunpack.c.l.b16 %v784
      %v810 = vpack.c.b16 %v807, %v806
      %v811 = vpack.c.b16 %v809, %v808
      %v815 = vsel %vm567, %v801, 0
      %817 = vmatprep.subr.bf16.mxu0 0
      %818 = vmatpush1.bf16.msra.mxu0 0
      %819 = vmatprep.subr.bf16.mxu0 0
      %820 = vmatpush1.bf16.msra.mxu0 0
      %821 = vmatprep.subr.bf16.mxu0 0
      %822 = vmatpush1.bf16.msra.mxu0 0
      %823 = vmatprep.subr.bf16.mxu0 0
      %824 = vmatpush1.bf16.msra.mxu0 0
      %825 = vmatprep.subr.bf16.mxu0 0
      %826 = vmatpush1.bf16.msra.mxu0 0
      %827 = vmatprep.subr.bf16.mxu0 0
      %828 = vmatpush1.bf16.msra.mxu0 0
      %829 = vmatprep.subr.bf16.mxu0 0
      %830 = vmatpush1.bf16.msra.mxu0 %v811
      %831 = vmatprep.subr.bf16.mxu0 0
      %832 = vmatpush1.bf16.msra.mxu0 %v810
      %833 = vmatprep.subr.bf16.mxu0 0
      %834 = vmatpush2.bf16.msra.mxu0 0
      %835 = vmatprep.subr.bf16.mxu0 0
      %836 = vmatpush2.bf16.msra.mxu0 0
      %837 = vmatprep.subr.bf16.mxu0 0
      %838 = vmatpush2.bf16.msra.mxu0 0
      %839 = vmatprep.subr.bf16.mxu0 0
      %840 = vmatpush2.bf16.msra.mxu0 0
      %841 = vmatprep.subr.bf16.mxu0 0
      %842 = vmatpush2.bf16.msra.mxu0 0
      %843 = vmatprep.subr.bf16.mxu0 0
      %844 = vmatpush2.bf16.msra.mxu0 0
      %845 = vmatprep.subr.bf16.mxu0 0
      %846 = vmatpush2.bf16.msra.mxu0 0
      %847 = vmatprep.subr.bf16.mxu0 0
      %848 = vmatpush2.bf16.msra.mxu0 0
      %849 = vmatprep.mubr.bf16.mxu0 0
      %850 = vmatmul.mubr.bf16.gmra.mxu0 %v815
      %v851 = vpop.f32.mrf.mxu0
      %v852 = vadd.f32 %v790, %v851
      %v853 = vpop.f32.mrf.mxu0
      %v854 = vpop.f32.mrf.mxu0
      %v855 = vadd.f32 %v795, %v854
      %v856 = vpop.f32.mrf.mxu0
      %857 = vdwg.mxu0
      %v858 = vmax.f32 %v852, 0.0
      %v859 = vmax.f32 %v855, 0.0
      %v860 = vpack.c.bf16 %v859, %v858
      %v861 = vld [vmem:[%s9] sm:$0xf]
      %v862 = vld [vmem:[%s9 + $0x4] sm:$0xf]
      %v863 = vld [vmem:[%s522] sm:$0xff]
      %v864 = vld [vmem:[%s522 + $0x8] sm:$0xff]
      %866 = vset.pattern.permute.xlu0 0
      %867 = vperm.xlu0 %866, %v863
      %v868 = vpop.permute.xlu0 %867
      %871 = vset.pattern.permute.xlu0 0
      %872 = vperm.xlu0 %871, %v864
      %v873 = vpop.permute.xlu0 %872
      %v877 = vunpack.c.l.b16 %v861
      %v878 = vunpack.c.l.b16 %v862
      %v879 = vpack.c.b16 %v878, %v877
      %vm880 = vcmask 523264
      %v882 = vsel %vm880, %v879, 0
      %884 = vmatprep.subr.bf16.mxu0 0
      %885 = vmatpush1.bf16.msra.mxu0 0
      %886 = vmatprep.subr.bf16.mxu0 0
      %887 = vmatpush1.bf16.msra.mxu0 0
      %888 = vmatprep.subr.bf16.mxu0 0
      %889 = vmatpush1.bf16.msra.mxu0 0
      %890 = vmatprep.subr.bf16.mxu0 0
      %891 = vmatpush1.bf16.msra.mxu0 0
      %892 = vmatprep.subr.bf16.mxu0 0
      %893 = vmatpush1.bf16.msra.mxu0 %v860
      %894 = vmatprep.subr.bf16.mxu0 0
      %895 = vmatpush1.bf16.msra.mxu0 %v778
      %896 = vmatprep.subr.bf16.mxu0 0
      %897 = vmatpush1.bf16.msra.mxu0 %v696
      %898 = vmatprep.subr.bf16.mxu0 0
      %899 = vmatpush1.bf16.msra.mxu0 %v614
      %900 = vmatprep.subr.bf16.mxu0 0
      %901 = vmatpush2.bf16.msra.mxu0 0
      %902 = vmatprep.subr.bf16.mxu0 0
      %903 = vmatpush2.bf16.msra.mxu0 0
      %904 = vmatprep.subr.bf16.mxu0 0
      %905 = vmatpush2.bf16.msra.mxu0 0
      %906 = vmatprep.subr.bf16.mxu0 0
      %907 = vmatpush2.bf16.msra.mxu0 0
      %908 = vmatprep.subr.bf16.mxu0 0
      %909 = vmatpush2.bf16.msra.mxu0 0
      %910 = vmatprep.subr.bf16.mxu0 0
      %911 = vmatpush2.bf16.msra.mxu0 0
      %912 = vmatprep.subr.bf16.mxu0 0
      %913 = vmatpush2.bf16.msra.mxu0 0
      %914 = vmatprep.subr.bf16.mxu0 0
      %915 = vmatpush2.bf16.msra.mxu0 0
      %916 = vmatprep.mubr.bf16.mxu0 0
      %917 = vmatmul.mubr.bf16.gmra.mxu0 %v882
      %v918 = vpop.f32.mrf.mxu0
      %v919 = vadd.f32 %v868, %v918
      %v920 = vpop.f32.mrf.mxu0
      %v921 = vpop.f32.mrf.mxu0
      %v922 = vadd.f32 %v873, %v921
      %v923 = vpop.f32.mrf.mxu0
      %924 = vdwg.mxu0
      %v925 = vmax.f32 %v919, 0.0
      %v926 = vmax.f32 %v922, 0.0
      %v927 = vpack.c.bf16 %v926, %v925
      %v929 = vunpack.c.l.b16 %v927
      %v930 = vunpack.c.h.b16 %v927
      %v931 = vpack.c.b16 %v929, %v929
      %v932 = vpack.c.b16 %v930, %v930
      %vm935 = vcmask 27648
      %936 = vst.msk [vmem:[%s530] sm:$0xf] %vm935, %v931
      %937 = vst.msk [vmem:[%s530 + $0x4] sm:$0xf] %vm935, %v932
      %p938 = scmp.lt.s32.totalorder %s26, 1
      %s939 = scalar_select %p938, %s26, 1
      %p940 = scmp.lt.s32.totalorder %s27, 0
      %s941 = scalar_select %p940, %s27, 0
      %s942 = smul.addr %s939, 2
      %s943 = sadd.s32 %s941, %s942
      %s944 = smul.addr %s943, 4
      %s945 = scalar_lea.vmem %s11, %s944
      // Predicated region
      $region65: #{deeplab_forward.7} parent=63 // pred_check
        %p946 = pneg %p318
      $region66: #{deeplab_forward.7} parent=63 // pred_check_branch
        %948 = sbr.rel (%p946) target = $region68
      $region67: #{deeplab_forward.7} parent=63 // pred_region
        _
      $region68: #{deeplab_forward.7} parent=63 // pred_fallthru
        _
    $region64: #{deeplab_forward.7} parent=5 // pred_fallthru
      _
    %p949 = scmp.le.s32.totalorder 2, %s17
    // Predicated region
    $region69: #{deeplab_forward.7} parent=5 // pred_check
      %p950 = pneg %p949
    $region70: #{deeplab_forward.7} parent=5 // pred_check_branch
      %952 = sbr.rel (%p950) target = $region72
    $region71: #{deeplab_forward.7} parent=5 // pred_region
      %s953 = ssub.s32 %s17, 2
      // Predicated region
      $region73: #{deeplab_forward.7} parent=71 // pred_check
        %p954 = pneg %p324
      $region74: #{deeplab_forward.7} parent=71 // pred_check_branch
        %956 = sbr.rel (%p954) target = $region76
      $region75: #{deeplab_forward.7} parent=71 // pred_region
        %p957 = scmp.lt.s32.totalorder %s28, 1
        %s958 = scalar_select %p957, %s28, 1
        %p959 = scmp.lt.s32.totalorder %s29, 0
        %s960 = scalar_select %p959, %s29, 0
        %s961 = smul.addr %s958, 2
        %s962 = sadd.s32 %s960, %s961
        %s963 = smul.addr %s962, 4
        %s964 = scalar_lea.vmem %s11, %s963
      $region76: #{deeplab_forward.7} parent=71 // pred_fallthru
        _
    $region72: #{deeplab_forward.7} parent=5 // pred_fallthru
      _
  $region6: #{deeplab_forward.7} parent=0 // loop_footer
    %s21 = sadd.s32 1, %s17
  $region7: #{deeplab_forward.7} parent=0 // loop_footer_branch
    %16 = sbr.rel target = $region3
  $region8: #{deeplab_forward.7} parent=0 // loop_exit
    _

</llo_original>
